<compile_context>
chip_gen: v7x
topology: tpu7x:2x2x1
jax: 0.10.0
libtpu: 0.0.40
codegen_flags: <defaults>
</compile_context>

<pallas_src>
import jax
import jax.numpy as jnp
from jax.experimental import pallas as pl
from jax.experimental.pallas import tpu as pltpu

B = 2            # batch
S = 8            # sequence length
H = 768          # BERT hidden size (cls_layer = Linear(768, 2))
C = 2            # num classes
C_PAD = 128      # lane-dense padded class dim
VOCAB = 32
TYPE_VOCAB = 2
TYPE_PAD = 8     # pad tiny token-type table to a full sublane group
OUT_ROWS = 8     # (8, 128) lane/sublane-dense output block


def _fused_forward_kernel(ids_ref, tok_ref, mask_ref,
                          we_ref, te_ref, wp_ref, bp_ref, wc_ref, bc_ref,
                          out_ref):
    """Fused: one-hot-count gather -> masked mean pool (on MXU) ->
    pooler (dense+tanh) -> padded cls linear -> softplus+1."""
    ids = ids_ref[...]            # (B, S) int32
    tok = tok_ref[...]            # (B, S) int32
    mask = mask_ref[...]          # (B, S) f32

    # ---- embedding gather + masked-sum pooling fused as MXU contractions ---
    # mean[b] = sum_s m[b,s]*(word_emb[ids[b,s]] + type_emb[tok[b,s]]) / sum_s m[b,s]
    #         = (counts_w[b] @ word_emb + counts_t[b] @ type_emb) / denom[b]
    w_iota = jax.lax.broadcasted_iota(jnp.int32, (B, S, VOCAB), 2)
    w_hot = jnp.where(ids[:, :, None] == w_iota, mask[:, :, None], 0.0)   # (B,S,V)
    counts_w = jnp.sum(w_hot, axis=1)                                     # (B,V)

    t_iota = jax.lax.broadcasted_iota(jnp.int32, (B, S, TYPE_PAD), 2)
    t_hot = jnp.where(tok[:, :, None] == t_iota, mask[:, :, None], 0.0)   # (B,S,8)
    counts_t = jnp.sum(t_hot, axis=1)                                     # (B,8)

    denom = jnp.maximum(jnp.sum(mask, axis=1, keepdims=True), 1e-9)       # (B,1)

    summed = (
        jnp.dot(counts_w.astype(jnp.bfloat16), we_ref[...],
                preferred_element_type=jnp.float32)
        + jnp.dot(counts_t.astype(jnp.bfloat16), te_ref[...],
                  preferred_element_type=jnp.float32)
    )                                                                     # (B,H) f32
    mean = summed / denom                                                 # (B,H) f32

    # ---- surrogate BERT pooler: dense(H, H) + tanh (bf16 MXU, f32 acc) -----
    pooled = jnp.tanh(
        jnp.dot(mean.astype(jnp.bfloat16), wp_ref[...],
                preferred_element_type=jnp.float32) + bp_ref[...]
    )                                                                     # (B,H) f32

    # ---- dropout(p=0.1) == identity (eval); cls layer, lane-padded to 128 --
    logits = (jnp.dot(pooled.astype(jnp.bfloat16), wc_ref[...],
                      preferred_element_type=jnp.float32)
              + bc_ref[...])                                              # (B,128)
    alpha = jax.nn.softplus(logits) + 1.0                                 # (B,128)

    # single lane-dense (8,128) store: rows [0,B) = logits, rows [B,2B) = alpha
    out_ref[...] = jnp.concatenate(
        [logits, alpha,
         jnp.zeros((OUT_ROWS - 2 * B, C_PAD), jnp.float32)], axis=0)


def cls_forward_pallas(q_ids, token, q_mask, params):
    vmem = pl.BlockSpec(memory_space=pltpu.MemorySpace.VMEM)
    out = pl.pallas_call(
        _fused_forward_kernel,
        out_shape=jax.ShapeDtypeStruct((OUT_ROWS, C_PAD), jnp.float32),
        in_specs=[vmem] * 9,
        out_specs=vmem,
    )(q_ids.astype(jnp.int32), token.astype(jnp.int32),
      q_mask.astype(jnp.float32),
      params["word_emb"], params["type_emb"],
      params["w_pool"], params["b_pool"],
      params["w_cls"], params["b_cls"])
    logits = out[0:B, 0:C]
    alpha = out[B:2 * B, 0:C]
    return logits, alpha


def sentence_pair_classifier_forward(params, q_ids, q_mask, token, p_label):
    del p_label  # unused in the PyTorch forward as well
    return cls_forward_pallas(q_ids, token, q_mask, params)


def init_params(key):
    k1, k2, k3, k4 = jax.random.split(key, 4)
    scale = 0.02
    word_emb = scale * jax.random.normal(k1, (VOCAB, H), jnp.float32)
    type_emb = scale * jax.random.normal(k2, (TYPE_VOCAB, H), jnp.float32)
    type_emb = jnp.pad(type_emb, ((0, TYPE_PAD - TYPE_VOCAB), (0, 0)))
    w_pool = scale * jax.random.normal(k3, (H, H), jnp.float32)
    w_cls = scale * jax.random.normal(k4, (H, C), jnp.float32)
    w_cls = jnp.pad(w_cls, ((0, 0), (0, C_PAD - C)))  # lane-dense padded N
    return {
        # bf16 tables/weights: halves the dominant HBM->VMEM weight DMA;
        # matmuls still accumulate in f32 via preferred_element_type.
        "word_emb": word_emb.astype(jnp.bfloat16),     # (VOCAB, H)
        "type_emb": type_emb.astype(jnp.bfloat16),     # (TYPE_PAD, H)
        "w_pool": w_pool.astype(jnp.bfloat16),         # (H, H)
        "b_pool": jnp.zeros((1, H), jnp.float32),
        "w_cls": w_cls.astype(jnp.bfloat16),           # (H, C_PAD)
        "b_cls": jnp.zeros((1, C_PAD), jnp.float32),
    }


if __name__ == "__main__":
    key = jax.random.PRNGKey(0)
    pk, ik, tk = jax.random.split(key, 3)

    params = init_params(pk)

    q_ids = jax.random.randint(ik, (B, S), 0, VOCAB, dtype=jnp.int32)
    # attention mask: all valid except the last two positions of sample 1
    q_mask = jnp.ones((B, S), jnp.int32).at[1, S - 2:].set(0)
    token = jax.random.randint(tk, (B, S), 0, TYPE_VOCAB, dtype=jnp.int32)
    p_label = jnp.zeros((B,), jnp.int32)

    logits, alpha = jax.jit(sentence_pair_classifier_forward)(
        params, q_ids, q_mask, token, p_label)
    jax.block_until_ready((logits, alpha))

    assert logits.shape == (B, C) and alpha.shape == (B, C)
    assert bool(jnp.all(alpha > 1.0))          # softplus(x) + 1 > 1
    assert bool(jnp.all(jnp.isfinite(logits)))
    print("KERNEL_OK")
</pallas_src>

<mosaic_0001>
module attributes {stable_mosaic.version = 11 : i64} {
  func.func @_fused_forward_kernel(%arg0: memref<2x8xi32, #tpu.memory_space<vmem>>, %arg1: memref<2x8xi32, #tpu.memory_space<vmem>>, %arg2: memref<2x8xf32, #tpu.memory_space<vmem>>, %arg3: memref<32x768xbf16, #tpu.memory_space<vmem>>, %arg4: memref<8x768xbf16, #tpu.memory_space<vmem>>, %arg5: memref<768x768xbf16, #tpu.memory_space<vmem>>, %arg6: memref<1x768xf32, #tpu.memory_space<vmem>>, %arg7: memref<768x128xbf16, #tpu.memory_space<vmem>>, %arg8: memref<1x128xf32, #tpu.memory_space<vmem>>, %arg9: memref<8x128xf32, #tpu.memory_space<vmem>>) attributes {dimension_semantics = [], scalar_prefetch = 0 : i64, scratch_operands = 0 : i64, tpu.core_type = #tpu.core_type<tc>} {
    %c0 = arith.constant 0 : index
    %c0_0 = arith.constant 0 : index
    %0 = vector.load %arg0[%c0, %c0_0] : memref<2x8xi32, #tpu.memory_space<vmem>>, vector<2x8xi32>
    %c0_1 = arith.constant 0 : index
    %c0_2 = arith.constant 0 : index
    %1 = vector.load %arg1[%c0_1, %c0_2] : memref<2x8xi32, #tpu.memory_space<vmem>>, vector<2x8xi32>
    %c0_3 = arith.constant 0 : index
    %c0_4 = arith.constant 0 : index
    %2 = vector.load %arg2[%c0_3, %c0_4] : memref<2x8xf32, #tpu.memory_space<vmem>>, vector<2x8xf32>
    %3 = tpu.iota {dimensions = array<i32: 2>} : vector<2x8x32xi32>
    %4 = vector.shape_cast %0 : vector<2x8xi32> to vector<2x8x1xi32>
    %5 = vector.broadcast %4 : vector<2x8x1xi32> to vector<2x8x32xi32>
    %6 = arith.cmpi eq, %5, %3 : vector<2x8x32xi32>
    %7 = vector.shape_cast %2 : vector<2x8xf32> to vector<2x8x1xf32>
    %cst = arith.constant 0.000000e+00 : f32
    %8 = vector.shape_cast %7 : vector<2x8x1xf32> to vector<2x8x1xf32>
    %9 = vector.broadcast %8 : vector<2x8x1xf32> to vector<2x8x32xf32>
    %10 = vector.broadcast %cst : f32 to vector<2x8x32xf32>
    %11 = arith.select %6, %9, %10 : vector<2x8x32xi1>, vector<2x8x32xf32>
    %cst_5 = arith.constant dense<0.000000e+00> : vector<2x32xf32>
    %12 = vector.multi_reduction <add>, %11, %cst_5 [1] : vector<2x8x32xf32> to vector<2x32xf32>
    %13 = tpu.iota {dimensions = array<i32: 2>} : vector<2x8x8xi32>
    %14 = vector.shape_cast %1 : vector<2x8xi32> to vector<2x8x1xi32>
    %15 = vector.broadcast %14 : vector<2x8x1xi32> to vector<2x8x8xi32>
    %16 = arith.cmpi eq, %15, %13 : vector<2x8x8xi32>
    %17 = vector.shape_cast %2 : vector<2x8xf32> to vector<2x8x1xf32>
    %cst_6 = arith.constant 0.000000e+00 : f32
    %18 = vector.shape_cast %17 : vector<2x8x1xf32> to vector<2x8x1xf32>
    %19 = vector.broadcast %18 : vector<2x8x1xf32> to vector<2x8x8xf32>
    %20 = vector.broadcast %cst_6 : f32 to vector<2x8x8xf32>
    %21 = arith.select %16, %19, %20 : vector<2x8x8xi1>, vector<2x8x8xf32>
    %cst_7 = arith.constant dense<0.000000e+00> : vector<2x8xf32>
    %22 = vector.multi_reduction <add>, %21, %cst_7 [1] : vector<2x8x8xf32> to vector<2x8xf32>
    %cst_8 = arith.constant dense<0.000000e+00> : vector<2xf32>
    %23 = vector.multi_reduction <add>, %2, %cst_8 [1] : vector<2x8xf32> to vector<2xf32>
    %24 = vector.shape_cast %23 : vector<2xf32> to vector<2x1xf32>
    %cst_9 = arith.constant 9.99999971E-10 : f32
    %25 = vector.broadcast %cst_9 : f32 to vector<2x1xf32>
    %26 = arith.maximumf %24, %25 : vector<2x1xf32>
    %27 = arith.truncf %12 : vector<2x32xf32> to vector<2x32xbf16>
    %c0_10 = arith.constant 0 : index
    %c0_11 = arith.constant 0 : index
    %28 = vector.load %arg3[%c0_10, %c0_11] : memref<32x768xbf16, #tpu.memory_space<vmem>>, vector<32x768xbf16>
    %cst_12 = arith.constant dense<0.000000e+00> : vector<2x768xf32>
    %29 = tpu.matmul %27, %28, %cst_12 {dimension_numbers = #tpu.dot_dimension_numbers<[1], [0], [0], [1], [0, 0, 1, 1], [], []>} : vector<2x32xbf16>, vector<32x768xbf16>, vector<2x768xf32> -> vector<2x768xf32>
    %30 = arith.truncf %22 : vector<2x8xf32> to vector<2x8xbf16>
    %c0_13 = arith.constant 0 : index
    %c0_14 = arith.constant 0 : index
    %31 = vector.load %arg4[%c0_13, %c0_14] : memref<8x768xbf16, #tpu.memory_space<vmem>>, vector<8x768xbf16>
    %cst_15 = arith.constant dense<0.000000e+00> : vector<2x768xf32>
    %32 = tpu.matmul %30, %31, %cst_15 {dimension_numbers = #tpu.dot_dimension_numbers<[1], [0], [0], [1], [0, 0, 1, 1], [], []>} : vector<2x8xbf16>, vector<8x768xbf16>, vector<2x768xf32> -> vector<2x768xf32>
    %33 = arith.addf %29, %32 : vector<2x768xf32>
    %34 = vector.broadcast %26 : vector<2x1xf32> to vector<2x768xf32>
    %35 = arith.divf %33, %34 : vector<2x768xf32>
    %36 = arith.truncf %35 : vector<2x768xf32> to vector<2x768xbf16>
    %c0_16 = arith.constant 0 : index
    %c0_17 = arith.constant 0 : index
    %37 = vector.load %arg5[%c0_16, %c0_17] : memref<768x768xbf16, #tpu.memory_space<vmem>>, vector<768x768xbf16>
    %cst_18 = arith.constant dense<0.000000e+00> : vector<2x768xf32>
    %38 = tpu.matmul %36, %37, %cst_18 {dimension_numbers = #tpu.dot_dimension_numbers<[1], [0], [0], [1], [0, 0, 1, 1], [], []>} : vector<2x768xbf16>, vector<768x768xbf16>, vector<2x768xf32> -> vector<2x768xf32>
    %c0_19 = arith.constant 0 : index
    %c0_20 = arith.constant 0 : index
    %39 = vector.load %arg6[%c0_19, %c0_20] : memref<1x768xf32, #tpu.memory_space<vmem>>, vector<1x768xf32>
    %40 = vector.broadcast %39 : vector<1x768xf32> to vector<2x768xf32>
    %41 = arith.addf %38, %40 : vector<2x768xf32>
    %42 = math.tanh %41 : vector<2x768xf32>
    %43 = arith.truncf %42 : vector<2x768xf32> to vector<2x768xbf16>
    %c0_21 = arith.constant 0 : index
    %c0_22 = arith.constant 0 : index
    %44 = vector.load %arg7[%c0_21, %c0_22] : memref<768x128xbf16, #tpu.memory_space<vmem>>, vector<768x128xbf16>
    %cst_23 = arith.constant dense<0.000000e+00> : vector<2x128xf32>
    %45 = tpu.matmul %43, %44, %cst_23 {dimension_numbers = #tpu.dot_dimension_numbers<[1], [0], [0], [1], [0, 0, 1, 1], [], []>} : vector<2x768xbf16>, vector<768x128xbf16>, vector<2x128xf32> -> vector<2x128xf32>
    %c0_24 = arith.constant 0 : index
    %c0_25 = arith.constant 0 : index
    %46 = vector.load %arg8[%c0_24, %c0_25] : memref<1x128xf32, #tpu.memory_space<vmem>>, vector<1x128xf32>
    %47 = vector.broadcast %46 : vector<1x128xf32> to vector<2x128xf32>
    %48 = arith.addf %45, %47 : vector<2x128xf32>
    %cst_26 = arith.constant 0.000000e+00 : f32
    %49 = vector.broadcast %cst_26 : f32 to vector<2x128xf32>
    %50 = arith.maximumf %48, %49 : vector<2x128xf32>
    %51 = vector.broadcast %cst_26 : f32 to vector<2x128xf32>
    %52 = arith.subf %48, %51 : vector<2x128xf32>
    %53 = arith.cmpf one, %52, %52 : vector<2x128xf32>
    %54 = vector.broadcast %cst_26 : f32 to vector<2x128xf32>
    %55 = arith.addf %48, %54 : vector<2x128xf32>
    %56 = math.absf %52 : vector<2x128xf32>
    %cst_27 = arith.constant 0.000000e+00 : f32
    %57 = vector.broadcast %cst_27 : f32 to vector<2x128xf32>
    %58 = arith.subf %57, %56 : vector<2x128xf32>
    %59 = math.exp %58 : vector<2x128xf32>
    %60 = math.log1p %59 : vector<2x128xf32>
    %61 = arith.addf %50, %60 : vector<2x128xf32>
    %62 = arith.select %53, %55, %61 : vector<2x128xi1>, vector<2x128xf32>
    %cst_28 = arith.constant 1.000000e+00 : f32
    %63 = vector.broadcast %cst_28 : f32 to vector<2x128xf32>
    %64 = arith.addf %62, %63 : vector<2x128xf32>
    %cst_29 = arith.constant 0.000000e+00 : f32
    %65 = vector.broadcast %cst_29 : f32 to vector<4x128xf32>
    %66 = tpu.concatenate %48, %64, %65 in 0 : vector<2x128xf32>, vector<2x128xf32>, vector<4x128xf32> -> vector<8x128xf32>
    %c0_30 = arith.constant 0 : index
    %c0_31 = arith.constant 0 : index
    %67 = vector.load %arg9[%c0_30, %c0_31] : memref<8x128xf32, #tpu.memory_space<vmem>>, vector<8x128xf32>
    tpu.vector_store %arg9[%c0_30, %c0_31], %66 {strides = array<i32>} : memref<8x128xf32, #tpu.memory_space<vmem>>, vector<8x128xf32>,
    return
  }
}

</mosaic_0001>

<llo_original>
// kernel: sentence_pair_classifier_forward.1
$region0: #{sentence_pair_classifier_forward.1}
  #allocation0 [shape = 'u32[]', space=smem, size = 0x4, offset = 0x4, fixed_abs, tag = 'smem constant byte address 0x4 - core index']
  #allocation1 [shape = 'u32[144,128]{1,0:T(1,128)}', space=vmem, size = 0x12000, scoped, tag = 'internal scratch']
  %s0 = inlined_call_operand.hbm [shape: s32[2,8], index: 0, kind: input, shape index: {}]
  %s1 = inlined_call_operand.hbm [shape: s32[2,8], index: 1, kind: input, shape index: {}]
  %s2 = inlined_call_operand.vmem [shape: f32[2,8], index: 2, kind: input, shape index: {}]
  %s3 = inlined_call_operand.hbm [shape: bf16[32,768], index: 3, kind: input, shape index: {}]
  %s4 = inlined_call_operand.hbm [shape: bf16[8,768], index: 4, kind: input, shape index: {}]
  %s5 = inlined_call_operand.hbm [shape: bf16[768,768], index: 5, kind: input, shape index: {}]
  %s6 = inlined_call_operand.hbm [shape: f32[1,768], index: 6, kind: input, shape index: {}]
  %s7 = inlined_call_operand.hbm [shape: bf16[768,128], index: 7, kind: input, shape index: {}]
  %s8 = inlined_call_operand.hbm [shape: f32[1,128], index: 8, kind: input, shape index: {}]
  %s9 = inlined_call_operand.vmem [shape: f32[8,128], index: 9, kind: output, shape index: {}]
  %s10 = sld [smem:[#allocation0]]
  $region78: #{sentence_pair_classifier_forward.1} parent=0
    _
  %s12 = ssub.s32 1, %s10
  %s13 = scalar_select 0, %s12, %s10
  $region1: #{sentence_pair_classifier_forward.1} parent=0
    #allocation2 [shape = 'u8[1024]{0}', space=vmem, size = 0x400, scoped, tag = 'input window, operand 0, single buffered']
    #allocation3 [shape = 's32[1]{0}', space=sflag, size = 0x4, scoped, tag = 'scoped memory for sentence_pair_classifier_forward.1']
    #allocation4 [shape = 'u8[1024]{0}', space=vmem, size = 0x400, scoped, tag = 'input window, operand 1, single buffered']
    #allocation5 [shape = 's32[1]{0}', space=sflag, size = 0x4, scoped, tag = 'scoped memory for sentence_pair_classifier_forward.1']
    #allocation6 [shape = 'u8[49152]{0}', space=vmem, size = 0xc000, scoped, tag = 'input window, operand 3, single buffered']
    #allocation7 [shape = 'u8[12288]{0}', space=vmem, size = 0x3000, scoped, tag = 'input window, operand 4, single buffered']
    #allocation8 [shape = 's32[1]{0}', space=sflag, size = 0x4, scoped, tag = 'scoped memory for sentence_pair_classifier_forward.1']
    #allocation9 [shape = 'u8[1179648]{0}', space=vmem, size = 0x120000, scoped, tag = 'input window, operand 5, single buffered']
    #allocation10 [shape = 'u8[3072]{0}', space=vmem, size = 0xc00, scoped, tag = 'input window, operand 6, single buffered']
    #allocation11 [shape = 's32[1]{0}', space=sflag, size = 0x4, scoped, tag = 'scoped memory for sentence_pair_classifier_forward.1']
    #allocation12 [shape = 'u8[196608]{0}', space=vmem, size = 0x30000, scoped, tag = 'input window, operand 7, single buffered']
    #allocation13 [shape = 'u8[512]{0}', space=vmem, size = 0x400, scoped, tag = 'input window, operand 8, single buffered']
    #allocation14 [shape = 's32[1]{0}', space=sflag, size = 0x4, scoped, tag = 'scoped memory for sentence_pair_classifier_forward.1']
    %14 = vsyncpa [#allocation3], 0
    %15 = vsyncpa [#allocation5], 0
    %16 = vsyncpa [#allocation8], 0
    %17 = vsyncpa [#allocation11], 0
    %18 = vsyncpa [#allocation14], 0
    // Predicated region
    $region2: #{sentence_pair_classifier_forward.1} parent=1 // pred_check
      _
    $region3: #{sentence_pair_classifier_forward.1} parent=1 // pred_check_branch
      %20 = sbr.rel (0) target = $region5
    $region4: #{sentence_pair_classifier_forward.1} parent=1 // pred_region
      %s22 = ssub.s32 32, 32
      %23 = vsyncadd [#allocation3], %s22
      %s25 = sshll.u32 [#allocation2], 4
      %s26 = int_to_ptr.vmem [resolvable:$true] %s25
      %28 = dma.hbm_to_vmem [thread:$0]  %s0, 32, %s26, [#allocation3]
    $region5: #{sentence_pair_classifier_forward.1} parent=1 // pred_fallthru
      _
    // Predicated region
    $region6: #{sentence_pair_classifier_forward.1} parent=1 // pred_check
      _
    $region7: #{sentence_pair_classifier_forward.1} parent=1 // pred_check_branch
      %30 = sbr.rel (0) target = $region9
    $region8: #{sentence_pair_classifier_forward.1} parent=1 // pred_region
      %s32 = ssub.s32 32, 32
      %33 = vsyncadd [#allocation5], %s32
      %s35 = sshll.u32 [#allocation4], 4
      %s36 = int_to_ptr.vmem [resolvable:$true] %s35
      %38 = dma.hbm_to_vmem [thread:$0]  %s1, 32, %s36, [#allocation5]
    $region9: #{sentence_pair_classifier_forward.1} parent=1 // pred_fallthru
      _
    // Predicated region
    $region10: #{sentence_pair_classifier_forward.1} parent=1 // pred_check
      _
    $region11: #{sentence_pair_classifier_forward.1} parent=1 // pred_check_branch
      %40 = sbr.rel (0) target = $region13
    $region12: #{sentence_pair_classifier_forward.1} parent=1 // pred_region
      _
    $region13: #{sentence_pair_classifier_forward.1} parent=1 // pred_fallthru
      _
    // Predicated region
    $region14: #{sentence_pair_classifier_forward.1} parent=1 // pred_check
      _
    $region15: #{sentence_pair_classifier_forward.1} parent=1 // pred_check_branch
      %42 = sbr.rel (0) target = $region17
    $region16: #{sentence_pair_classifier_forward.1} parent=1 // pred_region
      %s44 = ssub.s32 1536, 1536
      %45 = vsyncadd [#allocation5], %s44
      %s46 = sshll.u32 [#allocation6], 4
      %s47 = int_to_ptr.vmem [resolvable:$true] %s46
      %52 = dma.hbm_to_vmem [thread:$0]  %s3, 1536, %s47, [#allocation5], 384, 384, 24
    $region17: #{sentence_pair_classifier_forward.1} parent=1 // pred_fallthru
      _
    // Predicated region
    $region18: #{sentence_pair_classifier_forward.1} parent=1 // pred_check
      _
    $region19: #{sentence_pair_classifier_forward.1} parent=1 // pred_check_branch
      %54 = sbr.rel (0) target = $region21
    $region20: #{sentence_pair_classifier_forward.1} parent=1 // pred_region
      %s56 = ssub.s32 384, 384
      %57 = vsyncadd [#allocation8], %s56
      %s59 = sshll.u32 [#allocation7], 4
      %s60 = int_to_ptr.vmem [resolvable:$true] %s59
      %62 = dma.hbm_to_vmem [thread:$0]  %s4, 384, %s60, [#allocation8]
    $region21: #{sentence_pair_classifier_forward.1} parent=1 // pred_fallthru
      _
    // Predicated region
    $region22: #{sentence_pair_classifier_forward.1} parent=1 // pred_check
      _
    $region23: #{sentence_pair_classifier_forward.1} parent=1 // pred_check_branch
      %64 = sbr.rel (0) target = $region25
    $region24: #{sentence_pair_classifier_forward.1} parent=1 // pred_region
      %s66 = ssub.s32 36864, 36864
      %67 = vsyncadd [#allocation8], %s66
      %s68 = sshll.u32 [#allocation9], 4
      %s69 = int_to_ptr.vmem [resolvable:$true] %s68
      %74 = dma.hbm_to_vmem [thread:$0]  %s5, 36864, %s69, [#allocation8], 384, 384, 24
    $region25: #{sentence_pair_classifier_forward.1} parent=1 // pred_fallthru
      _
    // Predicated region
    $region26: #{sentence_pair_classifier_forward.1} parent=1 // pred_check
      _
    $region27: #{sentence_pair_classifier_forward.1} parent=1 // pred_check_branch
      %76 = sbr.rel (0) target = $region29
    $region28: #{sentence_pair_classifier_forward.1} parent=1 // pred_region
      %s78 = ssub.s32 96, 96
      %79 = vsyncadd [#allocation11], %s78
      %s81 = sshll.u32 [#allocation10], 4
      %s82 = int_to_ptr.vmem [resolvable:$true] %s81
      %84 = dma.hbm_to_vmem [thread:$0]  %s6, 96, %s82, [#allocation11]
    $region29: #{sentence_pair_classifier_forward.1} parent=1 // pred_fallthru
      _
    // Predicated region
    $region30: #{sentence_pair_classifier_forward.1} parent=1 // pred_check
      _
    $region31: #{sentence_pair_classifier_forward.1} parent=1 // pred_check_branch
      %86 = sbr.rel (0) target = $region33
    $region32: #{sentence_pair_classifier_forward.1} parent=1 // pred_region
      %s88 = ssub.s32 6144, 6144
      %89 = vsyncadd [#allocation11], %s88
      %s90 = sshll.u32 [#allocation12], 4
      %s91 = int_to_ptr.vmem [resolvable:$true] %s90
      %96 = dma.hbm_to_vmem [thread:$0]  %s7, 6144, %s91, [#allocation11], 64, 64, 4
    $region33: #{sentence_pair_classifier_forward.1} parent=1 // pred_fallthru
      _
    // Predicated region
    $region34: #{sentence_pair_classifier_forward.1} parent=1 // pred_check
      _
    $region35: #{sentence_pair_classifier_forward.1} parent=1 // pred_check_branch
      %98 = sbr.rel (0) target = $region37
    $region36: #{sentence_pair_classifier_forward.1} parent=1 // pred_region
      %s100 = ssub.s32 16, 16
      %101 = vsyncadd [#allocation14], %s100
      %s103 = sshll.u32 [#allocation13], 4
      %s104 = int_to_ptr.vmem [resolvable:$true] %s103
      %106 = dma.hbm_to_vmem [thread:$0]  %s8, 16, %s104, [#allocation14]
    $region37: #{sentence_pair_classifier_forward.1} parent=1 // pred_fallthru
      _
    // Predicated region
    $region38: #{sentence_pair_classifier_forward.1} parent=1 // pred_check
      _
    $region39: #{sentence_pair_classifier_forward.1} parent=1 // pred_check_branch
      %108 = sbr.rel (0) target = $region41
    $region40: #{sentence_pair_classifier_forward.1} parent=1 // pred_region
      %109 = dma.done [#allocation3], 32
    $region41: #{sentence_pair_classifier_forward.1} parent=1 // pred_fallthru
      _
    // Predicated region
    $region42: #{sentence_pair_classifier_forward.1} parent=1 // pred_check
      _
    $region43: #{sentence_pair_classifier_forward.1} parent=1 // pred_check_branch
      %111 = sbr.rel (0) target = $region45
    $region44: #{sentence_pair_classifier_forward.1} parent=1 // pred_region
      %112 = dma.done [#allocation5], 32
    $region45: #{sentence_pair_classifier_forward.1} parent=1 // pred_fallthru
      _
    // Predicated region
    $region46: #{sentence_pair_classifier_forward.1} parent=1 // pred_check
      _
    $region47: #{sentence_pair_classifier_forward.1} parent=1 // pred_check_branch
      %114 = sbr.rel (0) target = $region49
    $region48: #{sentence_pair_classifier_forward.1} parent=1 // pred_region
      %115 = dma.done [#allocation5], 1536
    $region49: #{sentence_pair_classifier_forward.1} parent=1 // pred_fallthru
      _
    // Predicated region
    $region50: #{sentence_pair_classifier_forward.1} parent=1 // pred_check
      _
    $region51: #{sentence_pair_classifier_forward.1} parent=1 // pred_check_branch
      %117 = sbr.rel (0) target = $region53
    $region52: #{sentence_pair_classifier_forward.1} parent=1 // pred_region
      %118 = dma.done [#allocation8], 384
    $region53: #{sentence_pair_classifier_forward.1} parent=1 // pred_fallthru
      _
    // Predicated region
    $region54: #{sentence_pair_classifier_forward.1} parent=1 // pred_check
      _
    $region55: #{sentence_pair_classifier_forward.1} parent=1 // pred_check_branch
      %120 = sbr.rel (0) target = $region57
    $region56: #{sentence_pair_classifier_forward.1} parent=1 // pred_region
      %121 = dma.done [#allocation8], 36864
    $region57: #{sentence_pair_classifier_forward.1} parent=1 // pred_fallthru
      _
    // Predicated region
    $region58: #{sentence_pair_classifier_forward.1} parent=1 // pred_check
      _
    $region59: #{sentence_pair_classifier_forward.1} parent=1 // pred_check_branch
      %123 = sbr.rel (0) target = $region61
    $region60: #{sentence_pair_classifier_forward.1} parent=1 // pred_region
      %124 = dma.done [#allocation11], 96
    $region61: #{sentence_pair_classifier_forward.1} parent=1 // pred_fallthru
      _
    // Predicated region
    $region62: #{sentence_pair_classifier_forward.1} parent=1 // pred_check
      _
    $region63: #{sentence_pair_classifier_forward.1} parent=1 // pred_check_branch
      %126 = sbr.rel (0) target = $region65
    $region64: #{sentence_pair_classifier_forward.1} parent=1 // pred_region
      %127 = dma.done [#allocation11], 6144
    $region65: #{sentence_pair_classifier_forward.1} parent=1 // pred_fallthru
      _
    // Predicated region
    $region66: #{sentence_pair_classifier_forward.1} parent=1 // pred_check
      _
    $region67: #{sentence_pair_classifier_forward.1} parent=1 // pred_check_branch
      %129 = sbr.rel (0) target = $region69
    $region68: #{sentence_pair_classifier_forward.1} parent=1 // pred_region
      %130 = dma.done [#allocation14], 16
    $region69: #{sentence_pair_classifier_forward.1} parent=1 // pred_fallthru
      _
    %v132 = vld [vmem:[#allocation2] sm:$0x3]
    %v133 = vld [vmem:[#allocation4] sm:$0x3]
    %v134 = vld [vmem:[%s2] sm:$0x3]
    %v135 = vlaneseq
    %v136 = vand.u32 %v135, 127
    %v137 = vlaneseq
    %v138 = vshrl.u32 %v137, 7
    %v139 = vsub.s32 0, %v138
    %v140 = vrot.slane %v132, %v139
    %142 = vbcast.lane.b32.xlu0 %v140, 256
    %v143 = vpop.permute.xlu0 %142
    %v144 = vlaneseq
    %v145 = vshrl.u32 %v144, 7
    %v146 = vsub.s32 1, %v145
    %v147 = vrot.slane %v132, %v146
    %149 = vbcast.lane.b32.xlu0 %v147, 256
    %v150 = vpop.permute.xlu0 %149
    %vm151 = vcmp.eq.s32.totalorder %v143, %v136
    %vm152 = vcmp.eq.s32.totalorder %v150, %v136
    %v153 = vlaneseq
    %v154 = vshrl.u32 %v153, 7
    %v155 = vsub.s32 0, %v154
    %v156 = vrot.slane %v134, %v155
    %158 = vbcast.lane.b32.xlu0 %v156, 256
    %v159 = vpop.permute.xlu0 %158
    %v160 = vlaneseq
    %v161 = vshrl.u32 %v160, 7
    %v162 = vsub.s32 1, %v161
    %v163 = vrot.slane %v134, %v162
    %165 = vbcast.lane.b32.xlu0 %v163, 256
    %v166 = vpop.permute.xlu0 %165
    %v167 = vsel %vm151, %v159, 0.0
    %v168 = vsel %vm152, %v166, 0.0
    %vm169 = vcmask 261120
    %v170 = vsel %vm169, %v167, 0.0
    %v171 = vrot.slane %v170, 4
    %v172 = vadd.f32 %v170, %v171
    %v173 = vrot.slane %v172, 2
    %v174 = vadd.f32 %v172, %v173
    %v175 = vrot.slane %v174, 1
    %v176 = vadd.f32 %v174, %v175
    %v177 = vsel %vm169, %v168, 0.0
    %v178 = vrot.slane %v177, 4
    %v179 = vadd.f32 %v177, %v178
    %v180 = vrot.slane %v179, 2
    %v181 = vadd.f32 %v179, %v180
    %v182 = vrot.slane %v181, 1
    %v183 = vadd.f32 %v181, %v182
    %v184 = vlaneseq
    %v185 = vshrl.u32 %v184, 7
    %v186 = vsub.s32 0, %v185
    %v187 = vrot.slane %v133, %v186
    %189 = vbcast.lane.b32.xlu0 %v187, 256
    %v190 = vpop.permute.xlu0 %189
    %v191 = vlaneseq
    %v192 = vshrl.u32 %v191, 7
    %v193 = vsub.s32 1, %v192
    %v194 = vrot.slane %v133, %v193
    %196 = vbcast.lane.b32.xlu0 %v194, 256
    %v197 = vpop.permute.xlu0 %196
    %vm198 = vcmp.eq.s32.totalorder %v190, %v136
    %vm199 = vcmp.eq.s32.totalorder %v197, %v136
    %v200 = vsel %vm198, %v159, 0.0
    %v201 = vsel %vm199, %v166, 0.0
    %vm202 = vcmask 64512
    %v203 = vsel %vm202, %v200, 0.0
    %v204 = vrot.slane %v203, 4
    %v205 = vadd.f32 %v203, %v204
    %v206 = vrot.slane %v205, 2
    %v207 = vadd.f32 %v205, %v206
    %v208 = vrot.slane %v207, 1
    %v209 = vadd.f32 %v207, %v208
    %v210 = vsel %vm202, %v201, 0.0
    %v211 = vrot.slane %v210, 4
    %v212 = vadd.f32 %v210, %v211
    %v213 = vrot.slane %v212, 2
    %v214 = vadd.f32 %v212, %v213
    %v215 = vrot.slane %v214, 1
    %v216 = vadd.f32 %v214, %v215
    %vm217 = vcmask 58368
    %v218 = vsel %vm217, %v134, 0.0
    %219 = vadd.xlane.f32.xlu0 %v218
    %v220 = vpop.xlane.xlu0 %219
    %v221 = vmax.f32 %v220, 1e-09
    %v222 = vpack.c.bf16 %v176, %v176
    %v223 = vpack.c.bf16 %v183, %v183
    %v224 = vld [vmem:[#allocation6] sm:$0xff]
    %v225 = vld [vmem:[#allocation6 + $0x8] sm:$0xff]
    %v226 = vld [vmem:[#allocation6 + $0x10] sm:$0xff]
    %v227 = vld [vmem:[#allocation6 + $0x18] sm:$0xff]
    %v228 = vld [vmem:[#allocation6 + $0x20] sm:$0xff]
    %v229 = vld [vmem:[#allocation6 + $0x28] sm:$0xff]
    %v230 = vld [vmem:[#allocation6 + $0x30] sm:$0xff]
    %v231 = vld [vmem:[#allocation6 + $0x38] sm:$0xff]
    %v232 = vld [vmem:[#allocation6 + $0x40] sm:$0xff]
    %v233 = vld [vmem:[#allocation6 + $0x48] sm:$0xff]
    %v234 = vld [vmem:[#allocation6 + $0x50] sm:$0xff]
    %v235 = vld [vmem:[#allocation6 + $0x58] sm:$0xff]
    %v236 = vpack.c.bf16 %v209, %v209
    %v237 = vpack.c.bf16 %v216, %v216
    %v238 = vld [vmem:[#allocation7] sm:$0xff]
    %v239 = vld [vmem:[#allocation7 + $0x8] sm:$0xff]
    %v240 = vld [vmem:[#allocation7 + $0x10] sm:$0xff]
    %v243 = vunpack.c.l.b16 %v236
    %v244 = vunpack.c.l.b16 %v237
    %vm245 = vcmask 1041409
    %v246 = vsel %vm245, %v244, %v243
    %v247 = vpack.c.b16 %v246, %v246
    %v251 = vunpack.c.l.b16 %v238
    %v252 = vunpack.c.h.b16 %v238
    %v253 = vunpack.c.l.b16 %v239
    %v254 = vunpack.c.h.b16 %v239
    %v255 = vunpack.c.l.b16 %v240
    %v256 = vunpack.c.h.b16 %v240
    %v257 = vpack.c.b16 %v251, %v251
    %v258 = vpack.c.b16 %v252, %v252
    %v259 = vpack.c.b16 %v253, %v253
    %v260 = vpack.c.b16 %v254, %v254
    %v261 = vpack.c.b16 %v255, %v255
    %v262 = vpack.c.b16 %v256, %v256
    %v264 = vsel %vm202, %v247, 0
    %vm266 = vcmask 1043456
    %v268 = vsel %vm266, %v257, 0
    %v271 = vsel %vm266, %v258, 0
    %v274 = vsel %vm266, %v259, 0
    %v277 = vsel %vm266, %v260, 0
    %v280 = vsel %vm266, %v261, 0
    %v283 = vsel %vm266, %v262, 0
    %285 = vmatprep.subr.bf16.mxu0 %v271
    %286 = vmatpush1.bf16.msra.mxu0 %v268
    %287 = vmatprep.subr.bf16.mxu0 0
    %288 = vmatpush1.bf16.msra.mxu0 0
    %289 = vmatprep.subr.bf16.mxu0 0
    %290 = vmatpush1.bf16.msra.mxu0 0
    %291 = vmatprep.subr.bf16.mxu0 0
    %292 = vmatpush1.bf16.msra.mxu0 0
    %293 = vmatprep.subr.bf16.mxu0 0
    %294 = vmatpush1.bf16.msra.mxu0 0
    %295 = vmatprep.subr.bf16.mxu0 0
    %296 = vmatpush1.bf16.msra.mxu0 0
    %297 = vmatprep.subr.bf16.mxu0 0
    %298 = vmatpush1.bf16.msra.mxu0 0
    %299 = vmatprep.subr.bf16.mxu0 0
    %300 = vmatpush1.bf16.msra.mxu0 0
    %301 = vmatprep.subr.bf16.mxu0 0
    %302 = vmatpush1.bf16.msra.mxu0 0
    %303 = vmatprep.subr.bf16.mxu0 0
    %304 = vmatpush1.bf16.msra.mxu0 0
    %305 = vmatprep.subr.bf16.mxu0 0
    %306 = vmatpush1.bf16.msra.mxu0 0
    %307 = vmatprep.subr.bf16.mxu0 0
    %308 = vmatpush1.bf16.msra.mxu0 0
    %309 = vmatprep.subr.bf16.mxu0 0
    %310 = vmatpush1.bf16.msra.mxu0 0
    %311 = vmatprep.subr.bf16.mxu0 0
    %312 = vmatpush1.bf16.msra.mxu0 0
    %313 = vmatprep.subr.bf16.mxu0 0
    %314 = vmatpush1.bf16.msra.mxu0 0
    %315 = vmatprep.subr.bf16.mxu0 0
    %316 = vmatpush1.bf16.msra.mxu0 0
    %317 = vmatprep.mubr.bf16.mxu0 0
    %318 = vmatmul.mubr.bf16.gmra.mrb[0].mxu0 %v264
    %v319 = vpop.f32.mrb[0].mxu0
    %v320 = vadd.f32 0.0, %v319
    %v321 = vpop.f32.mrb[0].mxu0
    %v322 = vadd.f32 0.0, %v321
    %v323 = vpop.f32.mrb[0].mxu0
    %v324 = vpop.f32.mrb[0].mxu0
    %325 = vdwg.mxu0
    %326 = vmatprep.subr.bf16.mxu0 %v277
    %327 = vmatpush1.bf16.msra.mxu0 %v274
    %328 = vmatprep.subr.bf16.mxu0 0
    %329 = vmatpush1.bf16.msra.mxu0 0
    %330 = vmatprep.subr.bf16.mxu0 0
    %331 = vmatpush1.bf16.msra.mxu0 0
    %332 = vmatprep.subr.bf16.mxu0 0
    %333 = vmatpush1.bf16.msra.mxu0 0
    %334 = vmatprep.subr.bf16.mxu0 0
    %335 = vmatpush1.bf16.msra.mxu0 0
    %336 = vmatprep.subr.bf16.mxu0 0
    %337 = vmatpush1.bf16.msra.mxu0 0
    %338 = vmatprep.subr.bf16.mxu0 0
    %339 = vmatpush1.bf16.msra.mxu0 0
    %340 = vmatprep.subr.bf16.mxu0 0
    %341 = vmatpush1.bf16.msra.mxu0 0
    %342 = vmatprep.subr.bf16.mxu0 0
    %343 = vmatpush1.bf16.msra.mxu0 0
    %344 = vmatprep.subr.bf16.mxu0 0
    %345 = vmatpush1.bf16.msra.mxu0 0
    %346 = vmatprep.subr.bf16.mxu0 0
    %347 = vmatpush1.bf16.msra.mxu0 0
    %348 = vmatprep.subr.bf16.mxu0 0
    %349 = vmatpush1.bf16.msra.mxu0 0
    %350 = vmatprep.subr.bf16.mxu0 0
    %351 = vmatpush1.bf16.msra.mxu0 0
    %352 = vmatprep.subr.bf16.mxu0 0
    %353 = vmatpush1.bf16.msra.mxu0 0
    %354 = vmatprep.subr.bf16.mxu0 0
    %355 = vmatpush1.bf16.msra.mxu0 0
    %356 = vmatprep.subr.bf16.mxu0 0
    %357 = vmatpush1.bf16.msra.mxu0 0
    %358 = vmatprep.mubr.bf16.mxu0 0
    %359 = vmatmul.mubr.bf16.gmra.mrb[0].mxu0 %v264
    %v360 = vpop.f32.mrb[0].mxu0
    %v361 = vadd.f32 0.0, %v360
    %v362 = vpop.f32.mrb[0].mxu0
    %v363 = vadd.f32 0.0, %v362
    %v364 = vpop.f32.mrb[0].mxu0
    %v365 = vpop.f32.mrb[0].mxu0
    %366 = vdwg.mxu0
    %367 = vmatprep.subr.bf16.mxu0 %v283
    %368 = vmatpush1.bf16.msra.mxu0 %v280
    %369 = vmatprep.subr.bf16.mxu0 0
    %370 = vmatpush1.bf16.msra.mxu0 0
    %371 = vmatprep.subr.bf16.mxu0 0
    %372 = vmatpush1.bf16.msra.mxu0 0
    %373 = vmatprep.subr.bf16.mxu0 0
    %374 = vmatpush1.bf16.msra.mxu0 0
    %375 = vmatprep.subr.bf16.mxu0 0
    %376 = vmatpush1.bf16.msra.mxu0 0
    %377 = vmatprep.subr.bf16.mxu0 0
    %378 = vmatpush1.bf16.msra.mxu0 0
    %379 = vmatprep.subr.bf16.mxu0 0
    %380 = vmatpush1.bf16.msra.mxu0 0
    %381 = vmatprep.subr.bf16.mxu0 0
    %382 = vmatpush1.bf16.msra.mxu0 0
    %383 = vmatprep.subr.bf16.mxu0 0
    %384 = vmatpush1.bf16.msra.mxu0 0
    %385 = vmatprep.subr.bf16.mxu0 0
    %386 = vmatpush1.bf16.msra.mxu0 0
    %387 = vmatprep.subr.bf16.mxu0 0
    %388 = vmatpush1.bf16.msra.mxu0 0
    %389 = vmatprep.subr.bf16.mxu0 0
    %390 = vmatpush1.bf16.msra.mxu0 0
    %391 = vmatprep.subr.bf16.mxu0 0
    %392 = vmatpush1.bf16.msra.mxu0 0
    %393 = vmatprep.subr.bf16.mxu0 0
    %394 = vmatpush1.bf16.msra.mxu0 0
    %395 = vmatprep.subr.bf16.mxu0 0
    %396 = vmatpush1.bf16.msra.mxu0 0
    %397 = vmatprep.subr.bf16.mxu0 0
    %398 = vmatpush1.bf16.msra.mxu0 0
    %399 = vmatprep.mubr.bf16.mxu0 0
    %400 = vmatmul.mubr.bf16.gmra.mrb[0].mxu0 %v264
    %v401 = vpop.f32.mrb[0].mxu0
    %v402 = vadd.f32 0.0, %v401
    %v403 = vpop.f32.mrb[0].mxu0
    %v404 = vadd.f32 0.0, %v403
    %v405 = vpop.f32.mrb[0].mxu0
    %v406 = vpop.f32.mrb[0].mxu0
    %407 = vdwg.mxu0
    %v410 = vunpack.c.l.b16 %v222
    %v411 = vunpack.c.l.b16 %v223
    %v412 = vsel %vm245, %v411, %v410
    %v413 = vpack.c.b16 %v412, %v412
    %v426 = vunpack.c.l.b16 %v224
    %v427 = vunpack.c.h.b16 %v224
    %v428 = vunpack.c.l.b16 %v225
    %v429 = vunpack.c.h.b16 %v225
    %v430 = vunpack.c.l.b16 %v226
    %v431 = vunpack.c.h.b16 %v226
    %v432 = vunpack.c.l.b16 %v227
    %v433 = vunpack.c.h.b16 %v227
    %v434 = vunpack.c.l.b16 %v228
    %v435 = vunpack.c.h.b16 %v228
    %v436 = vunpack.c.l.b16 %v229
    %v437 = vunpack.c.h.b16 %v229
    %v438 = vunpack.c.l.b16 %v230
    %v439 = vunpack.c.h.b16 %v230
    %v440 = vunpack.c.l.b16 %v231
    %v441 = vunpack.c.h.b16 %v231
    %v442 = vunpack.c.l.b16 %v232
    %v443 = vunpack.c.h.b16 %v232
    %v444 = vunpack.c.l.b16 %v233
    %v445 = vunpack.c.h.b16 %v233
    %v446 = vunpack.c.l.b16 %v234
    %v447 = vunpack.c.h.b16 %v234
    %v448 = vunpack.c.l.b16 %v235
    %v449 = vunpack.c.h.b16 %v235
    %v450 = vpack.c.b16 %v432, %v426
    %v451 = vpack.c.b16 %v433, %v427
    %v452 = vpack.c.b16 %v434, %v428
    %v453 = vpack.c.b16 %v435, %v429
    %v454 = vpack.c.b16 %v436, %v430
    %v455 = vpack.c.b16 %v437, %v431
    %v456 = vpack.c.b16 %v444, %v438
    %v457 = vpack.c.b16 %v445, %v439
    %v458 = vpack.c.b16 %v446, %v440
    %v459 = vpack.c.b16 %v447, %v441
    %v460 = vpack.c.b16 %v448, %v442
    %v461 = vpack.c.b16 %v449, %v443
    %v475 = vsel %vm169, %v413, 0
    %477 = vmatprep.subr.bf16.mxu0 %v451
    %478 = vmatpush1.bf16.msra.mxu0 %v450
    %479 = vmatprep.subr.bf16.mxu0 %v457
    %480 = vmatpush1.bf16.msra.mxu0 %v456
    %481 = vmatprep.subr.bf16.mxu0 0
    %482 = vmatpush1.bf16.msra.mxu0 0
    %483 = vmatprep.subr.bf16.mxu0 0
    %484 = vmatpush1.bf16.msra.mxu0 0
    %485 = vmatprep.subr.bf16.mxu0 0
    %486 = vmatpush1.bf16.msra.mxu0 0
    %487 = vmatprep.subr.bf16.mxu0 0
    %488 = vmatpush1.bf16.msra.mxu0 0
    %489 = vmatprep.subr.bf16.mxu0 0
    %490 = vmatpush1.bf16.msra.mxu0 0
    %491 = vmatprep.subr.bf16.mxu0 0
    %492 = vmatpush1.bf16.msra.mxu0 0
    %493 = vmatprep.subr.bf16.mxu0 0
    %494 = vmatpush1.bf16.msra.mxu0 0
    %495 = vmatprep.subr.bf16.mxu0 0
    %496 = vmatpush1.bf16.msra.mxu0 0
    %497 = vmatprep.subr.bf16.mxu0 0
    %498 = vmatpush1.bf16.msra.mxu0 0
    %499 = vmatprep.subr.bf16.mxu0 0
    %500 = vmatpush1.bf16.msra.mxu0 0
    %501 = vmatprep.subr.bf16.mxu0 0
    %502 = vmatpush1.bf16.msra.mxu0 0
    %503 = vmatprep.subr.bf16.mxu0 0
    %504 = vmatpush1.bf16.msra.mxu0 0
    %505 = vmatprep.subr.bf16.mxu0 0
    %506 = vmatpush1.bf16.msra.mxu0 0
    %507 = vmatprep.subr.bf16.mxu0 0
    %508 = vmatpush1.bf16.msra.mxu0 0
    %509 = vmatprep.mubr.bf16.mxu0 0
    %510 = vmatmul.mubr.bf16.gmra.mrb[0].mxu0 %v475
    %v511 = vpop.f32.mrb[0].mxu0
    %v512 = vadd.f32 %v320, %v511
    %v513 = vpop.f32.mrb[0].mxu0
    %v514 = vadd.f32 %v322, %v513
    %v515 = vpop.f32.mrb[0].mxu0
    %v516 = vpop.f32.mrb[0].mxu0
    %517 = vdwg.mxu0
    %518 = vmatprep.subr.bf16.mxu0 %v453
    %519 = vmatpush1.bf16.msra.mxu0 %v452
    %520 = vmatprep.subr.bf16.mxu0 %v459
    %521 = vmatpush1.bf16.msra.mxu0 %v458
    %522 = vmatprep.subr.bf16.mxu0 0
    %523 = vmatpush1.bf16.msra.mxu0 0
    %524 = vmatprep.subr.bf16.mxu0 0
    %525 = vmatpush1.bf16.msra.mxu0 0
    %526 = vmatprep.subr.bf16.mxu0 0
    %527 = vmatpush1.bf16.msra.mxu0 0
    %528 = vmatprep.subr.bf16.mxu0 0
    %529 = vmatpush1.bf16.msra.mxu0 0
    %530 = vmatprep.subr.bf16.mxu0 0
    %531 = vmatpush1.bf16.msra.mxu0 0
    %532 = vmatprep.subr.bf16.mxu0 0
    %533 = vmatpush1.bf16.msra.mxu0 0
    %534 = vmatprep.subr.bf16.mxu0 0
    %535 = vmatpush1.bf16.msra.mxu0 0
    %536 = vmatprep.subr.bf16.mxu0 0
    %537 = vmatpush1.bf16.msra.mxu0 0
    %538 = vmatprep.subr.bf16.mxu0 0
    %539 = vmatpush1.bf16.msra.mxu0 0
    %540 = vmatprep.subr.bf16.mxu0 0
    %541 = vmatpush1.bf16.msra.mxu0 0
    %542 = vmatprep.subr.bf16.mxu0 0
    %543 = vmatpush1.bf16.msra.mxu0 0
    %544 = vmatprep.subr.bf16.mxu0 0
    %545 = vmatpush1.bf16.msra.mxu0 0
    %546 = vmatprep.subr.bf16.mxu0 0
    %547 = vmatpush1.bf16.msra.mxu0 0
    %548 = vmatprep.subr.bf16.mxu0 0
    %549 = vmatpush1.bf16.msra.mxu0 0
    %550 = vmatprep.mubr.bf16.mxu0 0
    %551 = vmatmul.mubr.bf16.gmra.mrb[0].mxu0 %v475
    %v552 = vpop.f32.mrb[0].mxu0
    %v553 = vadd.f32 %v361, %v552
    %v554 = vpop.f32.mrb[0].mxu0
    %v555 = vadd.f32 %v363, %v554
    %v556 = vpop.f32.mrb[0].mxu0
    %v557 = vpop.f32.mrb[0].mxu0
    %558 = vdwg.mxu0
    %559 = vmatprep.subr.bf16.mxu0 %v455
    %560 = vmatpush1.bf16.msra.mxu0 %v454
    %561 = vmatprep.subr.bf16.mxu0 %v461
    %562 = vmatpush1.bf16.msra.mxu0 %v460
    %563 = vmatprep.subr.bf16.mxu0 0
    %564 = vmatpush1.bf16.msra.mxu0 0
    %565 = vmatprep.subr.bf16.mxu0 0
    %566 = vmatpush1.bf16.msra.mxu0 0
    %567 = vmatprep.subr.bf16.mxu0 0
    %568 = vmatpush1.bf16.msra.mxu0 0
    %569 = vmatprep.subr.bf16.mxu0 0
    %570 = vmatpush1.bf16.msra.mxu0 0
    %571 = vmatprep.subr.bf16.mxu0 0
    %572 = vmatpush1.bf16.msra.mxu0 0
    %573 = vmatprep.subr.bf16.mxu0 0
    %574 = vmatpush1.bf16.msra.mxu0 0
    %575 = vmatprep.subr.bf16.mxu0 0
    %576 = vmatpush1.bf16.msra.mxu0 0
    %577 = vmatprep.subr.bf16.mxu0 0
    %578 = vmatpush1.bf16.msra.mxu0 0
    %579 = vmatprep.subr.bf16.mxu0 0
    %580 = vmatpush1.bf16.msra.mxu0 0
    %581 = vmatprep.subr.bf16.mxu0 0
    %582 = vmatpush1.bf16.msra.mxu0 0
    %583 = vmatprep.subr.bf16.mxu0 0
    %584 = vmatpush1.bf16.msra.mxu0 0
    %585 = vmatprep.subr.bf16.mxu0 0
    %586 = vmatpush1.bf16.msra.mxu0 0
    %587 = vmatprep.subr.bf16.mxu0 0
    %588 = vmatpush1.bf16.msra.mxu0 0
    %589 = vmatprep.subr.bf16.mxu0 0
    %590 = vmatpush1.bf16.msra.mxu0 0
    %591 = vmatprep.mubr.bf16.mxu0 0
    %592 = vmatmul.mubr.bf16.gmra.mrb[0].mxu0 %v475
    %v593 = vpop.f32.mrb[0].mxu0
    %v594 = vadd.f32 %v402, %v593
    %v595 = vpop.f32.mrb[0].mxu0
    %v596 = vadd.f32 %v404, %v595
    %v597 = vpop.f32.mrb[0].mxu0
    %v598 = vpop.f32.mrb[0].mxu0
    %599 = vdwg.mxu0
    %v600 = vrcp.pop %v221
    %v601 = vmul.f32 %v512, %v600
    %v602 = vmul.f32 %v514, %v600
    %v603 = vmul.f32 %v553, %v600
    %v604 = vmul.f32 %v555, %v600
    %v605 = vmul.f32 %v594, %v600
    %v606 = vmul.f32 %v596, %v600
    %v607 = vpack.c.bf16 %v601, %v601
    %v608 = vpack.c.bf16 %v602, %v602
    %v609 = vpack.c.bf16 %v603, %v603
    %v610 = vpack.c.bf16 %v604, %v604
    %v611 = vpack.c.bf16 %v605, %v605
    %v612 = vpack.c.bf16 %v606, %v606
    %v613 = vld [vmem:[#allocation9] sm:$0xff]
    %v614 = vld [vmem:[#allocation9 + $0x8] sm:$0xff]
    %v615 = vld [vmem:[#allocation9 + $0x10] sm:$0xff]
    %v616 = vld [vmem:[#allocation9 + $0x18] sm:$0xff]
    %v617 = vld [vmem:[#allocation9 + $0x20] sm:$0xff]
    %v618 = vld [vmem:[#allocation9 + $0x28] sm:$0xff]
    %v619 = vld [vmem:[#allocation9 + $0x30] sm:$0xff]
    %v620 = vld [vmem:[#allocation9 + $0x38] sm:$0xff]
    %v621 = vld [vmem:[#allocation9 + $0x40] sm:$0xff]
    %v622 = vld [vmem:[#allocation9 + $0x48] sm:$0xff]
    %v623 = vld [vmem:[#allocation9 + $0x50] sm:$0xff]
    %v624 = vld [vmem:[#allocation9 + $0x58] sm:$0xff]
    %v625 = vld [vmem:[#allocation9 + $0x60] sm:$0xff]
    %v626 = vld [vmem:[#allocation9 + $0x68] sm:$0xff]
    %v627 = vld [vmem:[#allocation9 + $0x70] sm:$0xff]
    %v628 = vld [vmem:[#allocation9 + $0x78] sm:$0xff]
    %v629 = vld [vmem:[#allocation9 + $0x80] sm:$0xff]
    %v630 = vld [vmem:[#allocation9 + $0x88] sm:$0xff]
    %v631 = vld [vmem:[#allocation9 + $0x90] sm:$0xff]
    %v632 = vld [vmem:[#allocation9 + $0x98] sm:$0xff]
    %v633 = vld [vmem:[#allocation9 + $0xa0] sm:$0xff]
    %v634 = vld [vmem:[#allocation9 + $0xa8] sm:$0xff]
    %v635 = vld [vmem:[#allocation9 + $0xb0] sm:$0xff]
    %v636 = vld [vmem:[#allocation9 + $0xb8] sm:$0xff]
    %v637 = vld [vmem:[#allocation9 + $0xc0] sm:$0xff]
    %v638 = vld [vmem:[#allocation9 + $0xc8] sm:$0xff]
    %v639 = vld [vmem:[#allocation9 + $0xd0] sm:$0xff]
    %v640 = vld [vmem:[#allocation9 + $0xd8] sm:$0xff]
    %v641 = vld [vmem:[#allocation9 + $0xe0] sm:$0xff]
    %v642 = vld [vmem:[#allocation9 + $0xe8] sm:$0xff]
    %v643 = vld [vmem:[#allocation9 + $0xf0] sm:$0xff]
    %v644 = vld [vmem:[#allocation9 + $0xf8] sm:$0xff]
    %v645 = vld [vmem:[#allocation9 + $0x100] sm:$0xff]
    %v646 = vld [vmem:[#allocation9 + $0x108] sm:$0xff]
    %v647 = vld [vmem:[#allocation9 + $0x110] sm:$0xff]
    %v648 = vld [vmem:[#allocation9 + $0x118] sm:$0xff]
    %v649 = vld [vmem:[#allocation9 + $0x120] sm:$0xff]
    %v650 = vld [vmem:[#allocation9 + $0x128] sm:$0xff]
    %v651 = vld [vmem:[#allocation9 + $0x130] sm:$0xff]
    %v652 = vld [vmem:[#allocation9 + $0x138] sm:$0xff]
    %v653 = vld [vmem:[#allocation9 + $0x140] sm:$0xff]
    %v654 = vld [vmem:[#allocation9 + $0x148] sm:$0xff]
    %v655 = vld [vmem:[#allocation9 + $0x150] sm:$0xff]
    %v656 = vld [vmem:[#allocation9 + $0x158] sm:$0xff]
    %v657 = vld [vmem:[#allocation9 + $0x160] sm:$0xff]
    %v658 = vld [vmem:[#allocation9 + $0x168] sm:$0xff]
    %v659 = vld [vmem:[#allocation9 + $0x170] sm:$0xff]
    %v660 = vld [vmem:[#allocation9 + $0x178] sm:$0xff]
    %v661 = vld [vmem:[#allocation9 + $0x180] sm:$0xff]
    %v662 = vld [vmem:[#allocation9 + $0x188] sm:$0xff]
    %v663 = vld [vmem:[#allocation9 + $0x190] sm:$0xff]
    %v664 = vld [vmem:[#allocation9 + $0x198] sm:$0xff]
    %v665 = vld [vmem:[#allocation9 + $0x1a0] sm:$0xff]
    %v666 = vld [vmem:[#allocation9 + $0x1a8] sm:$0xff]
    %v667 = vld [vmem:[#allocation9 + $0x1b0] sm:$0xff]
    %v668 = vld [vmem:[#allocation9 + $0x1b8] sm:$0xff]
    %v669 = vld [vmem:[#allocation9 + $0x1c0] sm:$0xff]
    %v670 = vld [vmem:[#allocation9 + $0x1c8] sm:$0xff]
    %v671 = vld [vmem:[#allocation9 + $0x1d0] sm:$0xff]
    %v672 = vld [vmem:[#allocation9 + $0x1d8] sm:$0xff]
    %v673 = vld [vmem:[#allocation9 + $0x1e0] sm:$0xff]
    %v674 = vld [vmem:[#allocation9 + $0x1e8] sm:$0xff]
    %v675 = vld [vmem:[#allocation9 + $0x1f0] sm:$0xff]
    %v676 = vld [vmem:[#allocation9 + $0x1f8] sm:$0xff]
    %v677 = vld [vmem:[#allocation9 + $0x200] sm:$0xff]
    %v678 = vld [vmem:[#allocation9 + $0x208] sm:$0xff]
    %v679 = vld [vmem:[#allocation9 + $0x210] sm:$0xff]
    %v680 = vld [vmem:[#allocation9 + $0x218] sm:$0xff]
    %v681 = vld [vmem:[#allocation9 + $0x220] sm:$0xff]
    %v682 = vld [vmem:[#allocation9 + $0x228] sm:$0xff]
    %v683 = vld [vmem:[#allocation9 + $0x230] sm:$0xff]
    %v684 = vld [vmem:[#allocation9 + $0x238] sm:$0xff]
    %v685 = vld [vmem:[#allocation9 + $0x240] sm:$0xff]
    %v686 = vld [vmem:[#allocation9 + $0x248] sm:$0xff]
    %v687 = vld [vmem:[#allocation9 + $0x250] sm:$0xff]
    %v688 = vld [vmem:[#allocation9 + $0x258] sm:$0xff]
    %v689 = vld [vmem:[#allocation9 + $0x260] sm:$0xff]
    %v690 = vld [vmem:[#allocation9 + $0x268] sm:$0xff]
    %v691 = vld [vmem:[#allocation9 + $0x270] sm:$0xff]
    %v692 = vld [vmem:[#allocation9 + $0x278] sm:$0xff]
    %v693 = vld [vmem:[#allocation9 + $0x280] sm:$0xff]
    %v694 = vld [vmem:[#allocation9 + $0x288] sm:$0xff]
    %v695 = vld [vmem:[#allocation9 + $0x290] sm:$0xff]
    %v696 = vld [vmem:[#allocation9 + $0x298] sm:$0xff]
    %v697 = vld [vmem:[#allocation9 + $0x2a0] sm:$0xff]
    %v698 = vld [vmem:[#allocation9 + $0x2a8] sm:$0xff]
    %v699 = vld [vmem:[#allocation9 + $0x2b0] sm:$0xff]
    %v700 = vld [vmem:[#allocation9 + $0x2b8] sm:$0xff]
    %v701 = vld [vmem:[#allocation9 + $0x2c0] sm:$0xff]
    %v702 = vld [vmem:[#allocation9 + $0x2c8] sm:$0xff]
    %v703 = vld [vmem:[#allocation9 + $0x2d0] sm:$0xff]
    %v704 = vld [vmem:[#allocation9 + $0x2d8] sm:$0xff]
    %v705 = vld [vmem:[#allocation9 + $0x2e0] sm:$0xff]
    %v706 = vld [vmem:[#allocation9 + $0x2e8] sm:$0xff]
    %v707 = vld [vmem:[#allocation9 + $0x2f0] sm:$0xff]
    %v708 = vld [vmem:[#allocation9 + $0x2f8] sm:$0xff]
    %v709 = vld [vmem:[#allocation9 + $0x300] sm:$0xff]
    %v710 = vld [vmem:[#allocation9 + $0x308] sm:$0xff]
    %v711 = vld [vmem:[#allocation9 + $0x310] sm:$0xff]
    %v712 = vld [vmem:[#allocation9 + $0x318] sm:$0xff]
    %v713 = vld [vmem:[#allocation9 + $0x320] sm:$0xff]
    %v714 = vld [vmem:[#allocation9 + $0x328] sm:$0xff]
    %v715 = vld [vmem:[#allocation9 + $0x330] sm:$0xff]
    %v716 = vld [vmem:[#allocation9 + $0x338] sm:$0xff]
    %v717 = vld [vmem:[#allocation9 + $0x340] sm:$0xff]
    %v718 = vld [vmem:[#allocation9 + $0x348] sm:$0xff]
    %v719 = vld [vmem:[#allocation9 + $0x350] sm:$0xff]
    %v720 = vld [vmem:[#allocation9 + $0x358] sm:$0xff]
    %v721 = vld [vmem:[#allocation9 + $0x360] sm:$0xff]
    %v722 = vld [vmem:[#allocation9 + $0x368] sm:$0xff]
    %v723 = vld [vmem:[#allocation9 + $0x370] sm:$0xff]
    %v724 = vld [vmem:[#allocation9 + $0x378] sm:$0xff]
    %v725 = vld [vmem:[#allocation9 + $0x380] sm:$0xff]
    %v726 = vld [vmem:[#allocation9 + $0x388] sm:$0xff]
    %v727 = vld [vmem:[#allocation9 + $0x390] sm:$0xff]
    %v728 = vld [vmem:[#allocation9 + $0x398] sm:$0xff]
    %v729 = vld [vmem:[#allocation9 + $0x3a0] sm:$0xff]
    %v730 = vld [vmem:[#allocation9 + $0x3a8] sm:$0xff]
    %v731 = vld [vmem:[#allocation9 + $0x3b0] sm:$0xff]
    %v732 = vld [vmem:[#allocation9 + $0x3b8] sm:$0xff]
    %v733 = vld [vmem:[#allocation9 + $0x3c0] sm:$0xff]
    %v734 = vld [vmem:[#allocation9 + $0x3c8] sm:$0xff]
    %v735 = vld [vmem:[#allocation9 + $0x3d0] sm:$0xff]
    %v736 = vld [vmem:[#allocation9 + $0x3d8] sm:$0xff]
    %v737 = vld [vmem:[#allocation9 + $0x3e0] sm:$0xff]
    %v738 = vld [vmem:[#allocation9 + $0x3e8] sm:$0xff]
    %v739 = vld [vmem:[#allocation9 + $0x3f0] sm:$0xff]
    %v740 = vld [vmem:[#allocation9 + $0x3f8] sm:$0xff]
    %v741 = vld [vmem:[#allocation9 + $0x400] sm:$0xff]
    %v742 = vld [vmem:[#allocation9 + $0x408] sm:$0xff]
    %v743 = vld [vmem:[#allocation9 + $0x410] sm:$0xff]
    %v744 = vld [vmem:[#allocation9 + $0x418] sm:$0xff]
    %v745 = vld [vmem:[#allocation9 + $0x420] sm:$0xff]
    %v746 = vld [vmem:[#allocation9 + $0x428] sm:$0xff]
    %v747 = vld [vmem:[#allocation9 + $0x430] sm:$0xff]
    %v748 = vld [vmem:[#allocation9 + $0x438] sm:$0xff]
    %v749 = vld [vmem:[#allocation9 + $0x440] sm:$0xff]
    %v750 = vld [vmem:[#allocation9 + $0x448] sm:$0xff]
    %v751 = vld [vmem:[#allocation9 + $0x450] sm:$0xff]
    %v752 = vld [vmem:[#allocation9 + $0x458] sm:$0xff]
    %v753 = vld [vmem:[#allocation9 + $0x460] sm:$0xff]
    %v754 = vld [vmem:[#allocation9 + $0x468] sm:$0xff]
    %v755 = vld [vmem:[#allocation9 + $0x470] sm:$0xff]
    %v756 = vld [vmem:[#allocation9 + $0x478] sm:$0xff]
    %v757 = vld [vmem:[#allocation9 + $0x480] sm:$0xff]
    %v758 = vld [vmem:[#allocation9 + $0x488] sm:$0xff]
    %v759 = vld [vmem:[#allocation9 + $0x490] sm:$0xff]
    %v760 = vld [vmem:[#allocation9 + $0x498] sm:$0xff]
    %v761 = vld [vmem:[#allocation9 + $0x4a0] sm:$0xff]
    %v762 = vld [vmem:[#allocation9 + $0x4a8] sm:$0xff]
    %v763 = vld [vmem:[#allocation9 + $0x4b0] sm:$0xff]
    %v764 = vld [vmem:[#allocation9 + $0x4b8] sm:$0xff]
    %v765 = vld [vmem:[#allocation9 + $0x4c0] sm:$0xff]
    %v766 = vld [vmem:[#allocation9 + $0x4c8] sm:$0xff]
    %v767 = vld [vmem:[#allocation9 + $0x4d0] sm:$0xff]
    %v768 = vld [vmem:[#allocation9 + $0x4d8] sm:$0xff]
    %v769 = vld [vmem:[#allocation9 + $0x4e0] sm:$0xff]
    %v770 = vld [vmem:[#allocation9 + $0x4e8] sm:$0xff]
    %v771 = vld [vmem:[#allocation9 + $0x4f0] sm:$0xff]
    %v772 = vld [vmem:[#allocation9 + $0x4f8] sm:$0xff]
    %v773 = vld [vmem:[#allocation9 + $0x500] sm:$0xff]
    %v774 = vld [vmem:[#allocation9 + $0x508] sm:$0xff]
    %v775 = vld [vmem:[#allocation9 + $0x510] sm:$0xff]
    %v776 = vld [vmem:[#allocation9 + $0x518] sm:$0xff]
    %v777 = vld [vmem:[#allocation9 + $0x520] sm:$0xff]
    %v778 = vld [vmem:[#allocation9 + $0x528] sm:$0xff]
    %v779 = vld [vmem:[#allocation9 + $0x530] sm:$0xff]
    %v780 = vld [vmem:[#allocation9 + $0x538] sm:$0xff]
    %v781 = vld [vmem:[#allocation9 + $0x540] sm:$0xff]
    %v782 = vld [vmem:[#allocation9 + $0x548] sm:$0xff]
    %v783 = vld [vmem:[#allocation9 + $0x550] sm:$0xff]
    %v784 = vld [vmem:[#allocation9 + $0x558] sm:$0xff]
    %v785 = vld [vmem:[#allocation9 + $0x560] sm:$0xff]
    %v786 = vld [vmem:[#allocation9 + $0x568] sm:$0xff]
    %v787 = vld [vmem:[#allocation9 + $0x570] sm:$0xff]
    %v788 = vld [vmem:[#allocation9 + $0x578] sm:$0xff]
    %v789 = vld [vmem:[#allocation9 + $0x580] sm:$0xff]
    %v790 = vld [vmem:[#allocation9 + $0x588] sm:$0xff]
    %v791 = vld [vmem:[#allocation9 + $0x590] sm:$0xff]
    %v792 = vld [vmem:[#allocation9 + $0x598] sm:$0xff]
    %v793 = vld [vmem:[#allocation9 + $0x5a0] sm:$0xff]
    %v794 = vld [vmem:[#allocation9 + $0x5a8] sm:$0xff]
    %v795 = vld [vmem:[#allocation9 + $0x5b0] sm:$0xff]
    %v796 = vld [vmem:[#allocation9 + $0x5b8] sm:$0xff]
    %v797 = vld [vmem:[#allocation9 + $0x5c0] sm:$0xff]
    %v798 = vld [vmem:[#allocation9 + $0x5c8] sm:$0xff]
    %v799 = vld [vmem:[#allocation9 + $0x5d0] sm:$0xff]
    %v800 = vld [vmem:[#allocation9 + $0x5d8] sm:$0xff]
    %v801 = vld [vmem:[#allocation9 + $0x5e0] sm:$0xff]
    %v802 = vld [vmem:[#allocation9 + $0x5e8] sm:$0xff]
    %v803 = vld [vmem:[#allocation9 + $0x5f0] sm:$0xff]
    %v804 = vld [vmem:[#allocation9 + $0x5f8] sm:$0xff]
    %v805 = vld [vmem:[#allocation9 + $0x600] sm:$0xff]
    %v806 = vld [vmem:[#allocation9 + $0x608] sm:$0xff]
    %v807 = vld [vmem:[#allocation9 + $0x610] sm:$0xff]
    %v808 = vld [vmem:[#allocation9 + $0x618] sm:$0xff]
    %v809 = vld [vmem:[#allocation9 + $0x620] sm:$0xff]
    %v810 = vld [vmem:[#allocation9 + $0x628] sm:$0xff]
    %v811 = vld [vmem:[#allocation9 + $0x630] sm:$0xff]
    %v812 = vld [vmem:[#allocation9 + $0x638] sm:$0xff]
    %v813 = vld [vmem:[#allocation9 + $0x640] sm:$0xff]
    %v814 = vld [vmem:[#allocation9 + $0x648] sm:$0xff]
    %v815 = vld [vmem:[#allocation9 + $0x650] sm:$0xff]
    %v816 = vld [vmem:[#allocation9 + $0x658] sm:$0xff]
    %v817 = vld [vmem:[#allocation9 + $0x660] sm:$0xff]
    %v818 = vld [vmem:[#allocation9 + $0x668] sm:$0xff]
    %v819 = vld [vmem:[#allocation9 + $0x670] sm:$0xff]
    %v820 = vld [vmem:[#allocation9 + $0x678] sm:$0xff]
    %v821 = vld [vmem:[#allocation9 + $0x680] sm:$0xff]
    %v822 = vld [vmem:[#allocation9 + $0x688] sm:$0xff]
    %v823 = vld [vmem:[#allocation9 + $0x690] sm:$0xff]
    %v824 = vld [vmem:[#allocation9 + $0x698] sm:$0xff]
    %v825 = vld [vmem:[#allocation9 + $0x6a0] sm:$0xff]
    %v826 = vld [vmem:[#allocation9 + $0x6a8] sm:$0xff]
    %v827 = vld [vmem:[#allocation9 + $0x6b0] sm:$0xff]
    %v828 = vld [vmem:[#allocation9 + $0x6b8] sm:$0xff]
    %v829 = vld [vmem:[#allocation9 + $0x6c0] sm:$0xff]
    %v830 = vld [vmem:[#allocation9 + $0x6c8] sm:$0xff]
    %v831 = vld [vmem:[#allocation9 + $0x6d0] sm:$0xff]
    %v832 = vld [vmem:[#allocation9 + $0x6d8] sm:$0xff]
    %v833 = vld [vmem:[#allocation9 + $0x6e0] sm:$0xff]
    %v834 = vld [vmem:[#allocation9 + $0x6e8] sm:$0xff]
    %v835 = vld [vmem:[#allocation9 + $0x6f0] sm:$0xff]
    %v836 = vld [vmem:[#allocation9 + $0x6f8] sm:$0xff]
    %v837 = vld [vmem:[#allocation9 + $0x700] sm:$0xff]
    %v838 = vld [vmem:[#allocation9 + $0x708] sm:$0xff]
    %v839 = vld [vmem:[#allocation9 + $0x710] sm:$0xff]
    %v840 = vld [vmem:[#allocation9 + $0x718] sm:$0xff]
    %v841 = vld [vmem:[#allocation9 + $0x720] sm:$0xff]
    %v842 = vld [vmem:[#allocation9 + $0x728] sm:$0xff]
    %v843 = vld [vmem:[#allocation9 + $0x730] sm:$0xff]
    %v844 = vld [vmem:[#allocation9 + $0x738] sm:$0xff]
    %v845 = vld [vmem:[#allocation9 + $0x740] sm:$0xff]
    %v846 = vld [vmem:[#allocation9 + $0x748] sm:$0xff]
    %v847 = vld [vmem:[#allocation9 + $0x750] sm:$0xff]
    %v848 = vld [vmem:[#allocation9 + $0x758] sm:$0xff]
    %v849 = vld [vmem:[#allocation9 + $0x760] sm:$0xff]
    %v850 = vld [vmem:[#allocation9 + $0x768] sm:$0xff]
    %v851 = vld [vmem:[#allocation9 + $0x770] sm:$0xff]
    %v852 = vld [vmem:[#allocation9 + $0x778] sm:$0xff]
    %v853 = vld [vmem:[#allocation9 + $0x780] sm:$0xff]
    %v854 = vld [vmem:[#allocation9 + $0x788] sm:$0xff]
    %v855 = vld [vmem:[#allocation9 + $0x790] sm:$0xff]
    %v856 = vld [vmem:[#allocation9 + $0x798] sm:$0xff]
    %v857 = vld [vmem:[#allocation9 + $0x7a0] sm:$0xff]
    %v858 = vld [vmem:[#allocation9 + $0x7a8] sm:$0xff]
    %v859 = vld [vmem:[#allocation9 + $0x7b0] sm:$0xff]
    %v860 = vld [vmem:[#allocation9 + $0x7b8] sm:$0xff]
    %v861 = vld [vmem:[#allocation9 + $0x7c0] sm:$0xff]
    %v862 = vld [vmem:[#allocation9 + $0x7c8] sm:$0xff]
    %v863 = vld [vmem:[#allocation9 + $0x7d0] sm:$0xff]
    %v864 = vld [vmem:[#allocation9 + $0x7d8] sm:$0xff]
    %v865 = vld [vmem:[#allocation9 + $0x7e0] sm:$0xff]
    %v866 = vld [vmem:[#allocation9 + $0x7e8] sm:$0xff]
    %v867 = vld [vmem:[#allocation9 + $0x7f0] sm:$0xff]
    %v868 = vld [vmem:[#allocation9 + $0x7f8] sm:$0xff]
    %v869 = vld [vmem:[#allocation9 + $0x800] sm:$0xff]
    %v870 = vld [vmem:[#allocation9 + $0x808] sm:$0xff]
    %v871 = vld [vmem:[#allocation9 + $0x810] sm:$0xff]
    %v872 = vld [vmem:[#allocation9 + $0x818] sm:$0xff]
    %v873 = vld [vmem:[#allocation9 + $0x820] sm:$0xff]
    %v874 = vld [vmem:[#allocation9 + $0x828] sm:$0xff]
    %v875 = vld [vmem:[#allocation9 + $0x830] sm:$0xff]
    %v876 = vld [vmem:[#allocation9 + $0x838] sm:$0xff]
    %v877 = vld [vmem:[#allocation9 + $0x840] sm:$0xff]
    %v878 = vld [vmem:[#allocation9 + $0x848] sm:$0xff]
    %v879 = vld [vmem:[#allocation9 + $0x850] sm:$0xff]
    %v880 = vld [vmem:[#allocation9 + $0x858] sm:$0xff]
    %v881 = vld [vmem:[#allocation9 + $0x860] sm:$0xff]
    %v882 = vld [vmem:[#allocation9 + $0x868] sm:$0xff]
    %v883 = vld [vmem:[#allocation9 + $0x870] sm:$0xff]
    %v884 = vld [vmem:[#allocation9 + $0x878] sm:$0xff]
    %v885 = vld [vmem:[#allocation9 + $0x880] sm:$0xff]
    %v886 = vld [vmem:[#allocation9 + $0x888] sm:$0xff]
    %v887 = vld [vmem:[#allocation9 + $0x890] sm:$0xff]
    %v888 = vld [vmem:[#allocation9 + $0x898] sm:$0xff]
    %v889 = vld [vmem:[#allocation9 + $0x8a0] sm:$0xff]
    %v890 = vld [vmem:[#allocation9 + $0x8a8] sm:$0xff]
    %v891 = vld [vmem:[#allocation9 + $0x8b0] sm:$0xff]
    %v892 = vld [vmem:[#allocation9 + $0x8b8] sm:$0xff]
    %v893 = vld [vmem:[#allocation9 + $0x8c0] sm:$0xff]
    %v894 = vld [vmem:[#allocation9 + $0x8c8] sm:$0xff]
    %v895 = vld [vmem:[#allocation9 + $0x8d0] sm:$0xff]
    %v896 = vld [vmem:[#allocation9 + $0x8d8] sm:$0xff]
    %v897 = vld [vmem:[#allocation9 + $0x8e0] sm:$0xff]
    %v898 = vld [vmem:[#allocation9 + $0x8e8] sm:$0xff]
    %v899 = vld [vmem:[#allocation9 + $0x8f0] sm:$0xff]
    %v900 = vld [vmem:[#allocation9 + $0x8f8] sm:$0xff]
    %v901 = vld [vmem:[#allocation10] sm:$0x3f]
    %v903 = vlaneseq
    %v904 = vshrl.u32 %v903, 7
    %v905 = vsub.s32 0, %v904
    %v906 = vrot.slane %v901, %v905
    %v907 = vlaneseq
    %v908 = vshrl.u32 %v907, 7
    %v909 = vsub.s32 1, %v908
    %v910 = vrot.slane %v901, %v909
    %v911 = vlaneseq
    %v912 = vshrl.u32 %v911, 7
    %v913 = vsub.s32 2, %v912
    %v914 = vrot.slane %v901, %v913
    %v915 = vlaneseq
    %v916 = vshrl.u32 %v915, 7
    %v917 = vsub.s32 3, %v916
    %v918 = vrot.slane %v901, %v917
    %v919 = vlaneseq
    %v920 = vshrl.u32 %v919, 7
    %v921 = vsub.s32 4, %v920
    %v922 = vrot.slane %v901, %v921
    %v923 = vlaneseq
    %v924 = vshrl.u32 %v923, 7
    %v925 = vsub.s32 5, %v924
    %v926 = vrot.slane %v901, %v925
    %v1221 = vunpack.c.l.b16 %v613
    %v1222 = vunpack.c.h.b16 %v613
    %v1223 = vunpack.c.l.b16 %v614
    %v1224 = vunpack.c.h.b16 %v614
    %v1225 = vunpack.c.l.b16 %v615
    %v1226 = vunpack.c.h.b16 %v615
    %v1227 = vunpack.c.l.b16 %v616
    %v1228 = vunpack.c.h.b16 %v616
    %v1229 = vunpack.c.l.b16 %v617
    %v1230 = vunpack.c.h.b16 %v617
    %v1231 = vunpack.c.l.b16 %v618
    %v1232 = vunpack.c.h.b16 %v618
    %v1233 = vunpack.c.l.b16 %v619
    %v1234 = vunpack.c.h.b16 %v619
    %v1235 = vunpack.c.l.b16 %v620
    %v1236 = vunpack.c.h.b16 %v620
    %v1237 = vunpack.c.l.b16 %v621
    %v1238 = vunpack.c.h.b16 %v621
    %v1239 = vunpack.c.l.b16 %v622
    %v1240 = vunpack.c.h.b16 %v622
    %v1241 = vunpack.c.l.b16 %v623
    %v1242 = vunpack.c.h.b16 %v623
    %v1243 = vunpack.c.l.b16 %v624
    %v1244 = vunpack.c.h.b16 %v624
    %v1245 = vunpack.c.l.b16 %v625
    %v1246 = vunpack.c.h.b16 %v625
    %v1247 = vunpack.c.l.b16 %v626
    %v1248 = vunpack.c.h.b16 %v626
    %v1249 = vunpack.c.l.b16 %v627
    %v1250 = vunpack.c.h.b16 %v627
    %v1251 = vunpack.c.l.b16 %v628
    %v1252 = vunpack.c.h.b16 %v628
    %v1253 = vunpack.c.l.b16 %v629
    %v1254 = vunpack.c.h.b16 %v629
    %v1255 = vunpack.c.l.b16 %v630
    %v1256 = vunpack.c.h.b16 %v630
    %v1257 = vunpack.c.l.b16 %v631
    %v1258 = vunpack.c.h.b16 %v631
    %v1259 = vunpack.c.l.b16 %v632
    %v1260 = vunpack.c.h.b16 %v632
    %v1261 = vunpack.c.l.b16 %v633
    %v1262 = vunpack.c.h.b16 %v633
    %v1263 = vunpack.c.l.b16 %v634
    %v1264 = vunpack.c.h.b16 %v634
    %v1265 = vunpack.c.l.b16 %v635
    %v1266 = vunpack.c.h.b16 %v635
    %v1267 = vunpack.c.l.b16 %v636
    %v1268 = vunpack.c.h.b16 %v636
    %v1269 = vunpack.c.l.b16 %v637
    %v1270 = vunpack.c.h.b16 %v637
    %v1271 = vunpack.c.l.b16 %v638
    %v1272 = vunpack.c.h.b16 %v638
    %v1273 = vunpack.c.l.b16 %v639
    %v1274 = vunpack.c.h.b16 %v639
    %v1275 = vunpack.c.l.b16 %v640
    %v1276 = vunpack.c.h.b16 %v640
    %v1277 = vunpack.c.l.b16 %v641
    %v1278 = vunpack.c.h.b16 %v641
    %v1279 = vunpack.c.l.b16 %v642
    %v1280 = vunpack.c.h.b16 %v642
    %v1281 = vunpack.c.l.b16 %v643
    %v1282 = vunpack.c.h.b16 %v643
    %v1283 = vunpack.c.l.b16 %v644
    %v1284 = vunpack.c.h.b16 %v644
    %v1285 = vunpack.c.l.b16 %v645
    %v1286 = vunpack.c.h.b16 %v645
    %v1287 = vunpack.c.l.b16 %v646
    %v1288 = vunpack.c.h.b16 %v646
    %v1289 = vunpack.c.l.b16 %v647
    %v1290 = vunpack.c.h.b16 %v647
    %v1291 = vunpack.c.l.b16 %v648
    %v1292 = vunpack.c.h.b16 %v648
    %v1293 = vunpack.c.l.b16 %v649
    %v1294 = vunpack.c.h.b16 %v649
    %v1295 = vunpack.c.l.b16 %v650
    %v1296 = vunpack.c.h.b16 %v650
    %v1297 = vunpack.c.l.b16 %v651
    %v1298 = vunpack.c.h.b16 %v651
    %v1299 = vunpack.c.l.b16 %v652
    %v1300 = vunpack.c.h.b16 %v652
    %v1301 = vunpack.c.l.b16 %v653
    %v1302 = vunpack.c.h.b16 %v653
    %v1303 = vunpack.c.l.b16 %v654
    %v1304 = vunpack.c.h.b16 %v654
    %v1305 = vunpack.c.l.b16 %v655
    %v1306 = vunpack.c.h.b16 %v655
    %v1307 = vunpack.c.l.b16 %v656
    %v1308 = vunpack.c.h.b16 %v656
    %v1309 = vunpack.c.l.b16 %v657
    %v1310 = vunpack.c.h.b16 %v657
    %v1311 = vunpack.c.l.b16 %v658
    %v1312 = vunpack.c.h.b16 %v658
    %v1313 = vunpack.c.l.b16 %v659
    %v1314 = vunpack.c.h.b16 %v659
    %v1315 = vunpack.c.l.b16 %v660
    %v1316 = vunpack.c.h.b16 %v660
    %v1317 = vunpack.c.l.b16 %v661
    %v1318 = vunpack.c.h.b16 %v661
    %v1319 = vunpack.c.l.b16 %v662
    %v1320 = vunpack.c.h.b16 %v662
    %v1321 = vunpack.c.l.b16 %v663
    %v1322 = vunpack.c.h.b16 %v663
    %v1323 = vunpack.c.l.b16 %v664
    %v1324 = vunpack.c.h.b16 %v664
    %v1325 = vunpack.c.l.b16 %v665
    %v1326 = vunpack.c.h.b16 %v665
    %v1327 = vunpack.c.l.b16 %v666
    %v1328 = vunpack.c.h.b16 %v666
    %v1329 = vunpack.c.l.b16 %v667
    %v1330 = vunpack.c.h.b16 %v667
    %v1331 = vunpack.c.l.b16 %v668
    %v1332 = vunpack.c.h.b16 %v668
    %v1333 = vunpack.c.l.b16 %v669
    %v1334 = vunpack.c.h.b16 %v669
    %v1335 = vunpack.c.l.b16 %v670
    %v1336 = vunpack.c.h.b16 %v670
    %v1337 = vunpack.c.l.b16 %v671
    %v1338 = vunpack.c.h.b16 %v671
    %v1339 = vunpack.c.l.b16 %v672
    %v1340 = vunpack.c.h.b16 %v672
    %v1341 = vunpack.c.l.b16 %v673
    %v1342 = vunpack.c.h.b16 %v673
    %v1343 = vunpack.c.l.b16 %v674
    %v1344 = vunpack.c.h.b16 %v674
    %v1345 = vunpack.c.l.b16 %v675
    %v1346 = vunpack.c.h.b16 %v675
    %v1347 = vunpack.c.l.b16 %v676
    %v1348 = vunpack.c.h.b16 %v676
    %v1349 = vunpack.c.l.b16 %v677
    %v1350 = vunpack.c.h.b16 %v677
    %v1351 = vunpack.c.l.b16 %v678
    %v1352 = vunpack.c.h.b16 %v678
    %v1353 = vunpack.c.l.b16 %v679
    %v1354 = vunpack.c.h.b16 %v679
    %v1355 = vunpack.c.l.b16 %v680
    %v1356 = vunpack.c.h.b16 %v680
    %v1357 = vunpack.c.l.b16 %v681
    %v1358 = vunpack.c.h.b16 %v681
    %v1359 = vunpack.c.l.b16 %v682
    %v1360 = vunpack.c.h.b16 %v682
    %v1361 = vunpack.c.l.b16 %v683
    %v1362 = vunpack.c.h.b16 %v683
    %v1363 = vunpack.c.l.b16 %v684
    %v1364 = vunpack.c.h.b16 %v684
    %v1365 = vunpack.c.l.b16 %v685
    %v1366 = vunpack.c.h.b16 %v685
    %v1367 = vunpack.c.l.b16 %v686
    %v1368 = vunpack.c.h.b16 %v686
    %v1369 = vunpack.c.l.b16 %v687
    %v1370 = vunpack.c.h.b16 %v687
    %v1371 = vunpack.c.l.b16 %v688
    %v1372 = vunpack.c.h.b16 %v688
    %v1373 = vunpack.c.l.b16 %v689
    %v1374 = vunpack.c.h.b16 %v689
    %v1375 = vunpack.c.l.b16 %v690
    %v1376 = vunpack.c.h.b16 %v690
    %v1377 = vunpack.c.l.b16 %v691
    %v1378 = vunpack.c.h.b16 %v691
    %v1379 = vunpack.c.l.b16 %v692
    %v1380 = vunpack.c.h.b16 %v692
    %v1381 = vunpack.c.l.b16 %v693
    %v1382 = vunpack.c.h.b16 %v693
    %v1383 = vunpack.c.l.b16 %v694
    %v1384 = vunpack.c.h.b16 %v694
    %v1385 = vunpack.c.l.b16 %v695
    %v1386 = vunpack.c.h.b16 %v695
    %v1387 = vunpack.c.l.b16 %v696
    %v1388 = vunpack.c.h.b16 %v696
    %v1389 = vunpack.c.l.b16 %v697
    %v1390 = vunpack.c.h.b16 %v697
    %v1391 = vunpack.c.l.b16 %v698
    %v1392 = vunpack.c.h.b16 %v698
    %v1393 = vunpack.c.l.b16 %v699
    %v1394 = vunpack.c.h.b16 %v699
    %v1395 = vunpack.c.l.b16 %v700
    %v1396 = vunpack.c.h.b16 %v700
    %v1397 = vunpack.c.l.b16 %v701
    %v1398 = vunpack.c.h.b16 %v701
    %v1399 = vunpack.c.l.b16 %v702
    %v1400 = vunpack.c.h.b16 %v702
    %v1401 = vunpack.c.l.b16 %v703
    %v1402 = vunpack.c.h.b16 %v703
    %v1403 = vunpack.c.l.b16 %v704
    %v1404 = vunpack.c.h.b16 %v704
    %v1405 = vunpack.c.l.b16 %v705
    %v1406 = vunpack.c.h.b16 %v705
    %v1407 = vunpack.c.l.b16 %v706
    %v1408 = vunpack.c.h.b16 %v706
    %v1409 = vunpack.c.l.b16 %v707
    %v1410 = vunpack.c.h.b16 %v707
    %v1411 = vunpack.c.l.b16 %v708
    %v1412 = vunpack.c.h.b16 %v708
    %v1413 = vunpack.c.l.b16 %v709
    %v1414 = vunpack.c.h.b16 %v709
    %v1415 = vunpack.c.l.b16 %v710
    %v1416 = vunpack.c.h.b16 %v710
    %v1417 = vunpack.c.l.b16 %v711
    %v1418 = vunpack.c.h.b16 %v711
    %v1419 = vunpack.c.l.b16 %v712
    %v1420 = vunpack.c.h.b16 %v712
    %v1421 = vunpack.c.l.b16 %v713
    %v1422 = vunpack.c.h.b16 %v713
    %v1423 = vunpack.c.l.b16 %v714
    %v1424 = vunpack.c.h.b16 %v714
    %v1425 = vunpack.c.l.b16 %v715
    %v1426 = vunpack.c.h.b16 %v715
    %v1427 = vunpack.c.l.b16 %v716
    %v1428 = vunpack.c.h.b16 %v716
    %v1429 = vunpack.c.l.b16 %v717
    %v1430 = vunpack.c.h.b16 %v717
    %v1431 = vunpack.c.l.b16 %v718
    %v1432 = vunpack.c.h.b16 %v718
    %v1433 = vunpack.c.l.b16 %v719
    %v1434 = vunpack.c.h.b16 %v719
    %v1435 = vunpack.c.l.b16 %v720
    %v1436 = vunpack.c.h.b16 %v720
    %v1437 = vunpack.c.l.b16 %v721
    %v1438 = vunpack.c.h.b16 %v721
    %v1439 = vunpack.c.l.b16 %v722
    %v1440 = vunpack.c.h.b16 %v722
    %v1441 = vunpack.c.l.b16 %v723
    %v1442 = vunpack.c.h.b16 %v723
    %v1443 = vunpack.c.l.b16 %v724
    %v1444 = vunpack.c.h.b16 %v724
    %v1445 = vunpack.c.l.b16 %v725
    %v1446 = vunpack.c.h.b16 %v725
    %v1447 = vunpack.c.l.b16 %v726
    %v1448 = vunpack.c.h.b16 %v726
    %v1449 = vunpack.c.l.b16 %v727
    %v1450 = vunpack.c.h.b16 %v727
    %v1451 = vunpack.c.l.b16 %v728
    %v1452 = vunpack.c.h.b16 %v728
    %v1453 = vunpack.c.l.b16 %v729
    %v1454 = vunpack.c.h.b16 %v729
    %v1455 = vunpack.c.l.b16 %v730
    %v1456 = vunpack.c.h.b16 %v730
    %v1457 = vunpack.c.l.b16 %v731
    %v1458 = vunpack.c.h.b16 %v731
    %v1459 = vunpack.c.l.b16 %v732
    %v1460 = vunpack.c.h.b16 %v732
    %v1461 = vunpack.c.l.b16 %v733
    %v1462 = vunpack.c.h.b16 %v733
    %v1463 = vunpack.c.l.b16 %v734
    %v1464 = vunpack.c.h.b16 %v734
    %v1465 = vunpack.c.l.b16 %v735
    %v1466 = vunpack.c.h.b16 %v735
    %v1467 = vunpack.c.l.b16 %v736
    %v1468 = vunpack.c.h.b16 %v736
    %v1469 = vunpack.c.l.b16 %v737
    %v1470 = vunpack.c.h.b16 %v737
    %v1471 = vunpack.c.l.b16 %v738
    %v1472 = vunpack.c.h.b16 %v738
    %v1473 = vunpack.c.l.b16 %v739
    %v1474 = vunpack.c.h.b16 %v739
    %v1475 = vunpack.c.l.b16 %v740
    %v1476 = vunpack.c.h.b16 %v740
    %v1477 = vunpack.c.l.b16 %v741
    %v1478 = vunpack.c.h.b16 %v741
    %v1479 = vunpack.c.l.b16 %v742
    %v1480 = vunpack.c.h.b16 %v742
    %v1481 = vunpack.c.l.b16 %v743
    %v1482 = vunpack.c.h.b16 %v743
    %v1483 = vunpack.c.l.b16 %v744
    %v1484 = vunpack.c.h.b16 %v744
    %v1485 = vunpack.c.l.b16 %v745
    %v1486 = vunpack.c.h.b16 %v745
    %v1487 = vunpack.c.l.b16 %v746
    %v1488 = vunpack.c.h.b16 %v746
    %v1489 = vunpack.c.l.b16 %v747
    %v1490 = vunpack.c.h.b16 %v747
    %v1491 = vunpack.c.l.b16 %v748
    %v1492 = vunpack.c.h.b16 %v748
    %v1493 = vunpack.c.l.b16 %v749
    %v1494 = vunpack.c.h.b16 %v749
    %v1495 = vunpack.c.l.b16 %v750
    %v1496 = vunpack.c.h.b16 %v750
    %v1497 = vunpack.c.l.b16 %v751
    %v1498 = vunpack.c.h.b16 %v751
    %v1499 = vunpack.c.l.b16 %v752
    %v1500 = vunpack.c.h.b16 %v752
    %v1501 = vunpack.c.l.b16 %v753
    %v1502 = vunpack.c.h.b16 %v753
    %v1503 = vunpack.c.l.b16 %v754
    %v1504 = vunpack.c.h.b16 %v754
    %v1505 = vunpack.c.l.b16 %v755
    %v1506 = vunpack.c.h.b16 %v755
    %v1507 = vunpack.c.l.b16 %v756
    %v1508 = vunpack.c.h.b16 %v756
    %v1509 = vunpack.c.l.b16 %v757
    %v1510 = vunpack.c.h.b16 %v757
    %v1511 = vunpack.c.l.b16 %v758
    %v1512 = vunpack.c.h.b16 %v758
    %v1513 = vunpack.c.l.b16 %v759
    %v1514 = vunpack.c.h.b16 %v759
    %v1515 = vunpack.c.l.b16 %v760
    %v1516 = vunpack.c.h.b16 %v760
    %v1517 = vunpack.c.l.b16 %v761
    %v1518 = vunpack.c.h.b16 %v761
    %v1519 = vunpack.c.l.b16 %v762
    %v1520 = vunpack.c.h.b16 %v762
    %v1521 = vunpack.c.l.b16 %v763
    %v1522 = vunpack.c.h.b16 %v763
    %v1523 = vunpack.c.l.b16 %v764
    %v1524 = vunpack.c.h.b16 %v764
    %v1525 = vunpack.c.l.b16 %v765
    %v1526 = vunpack.c.h.b16 %v765
    %v1527 = vunpack.c.l.b16 %v766
    %v1528 = vunpack.c.h.b16 %v766
    %v1529 = vunpack.c.l.b16 %v767
    %v1530 = vunpack.c.h.b16 %v767
    %v1531 = vunpack.c.l.b16 %v768
    %v1532 = vunpack.c.h.b16 %v768
    %v1533 = vunpack.c.l.b16 %v769
    %v1534 = vunpack.c.h.b16 %v769
    %v1535 = vunpack.c.l.b16 %v770
    %v1536 = vunpack.c.h.b16 %v770
    %v1537 = vunpack.c.l.b16 %v771
    %v1538 = vunpack.c.h.b16 %v771
    %v1539 = vunpack.c.l.b16 %v772
    %v1540 = vunpack.c.h.b16 %v772
    %v1541 = vunpack.c.l.b16 %v773
    %v1542 = vunpack.c.h.b16 %v773
    %v1543 = vunpack.c.l.b16 %v774
    %v1544 = vunpack.c.h.b16 %v774
    %v1545 = vunpack.c.l.b16 %v775
    %v1546 = vunpack.c.h.b16 %v775
    %v1547 = vunpack.c.l.b16 %v776
    %v1548 = vunpack.c.h.b16 %v776
    %v1549 = vunpack.c.l.b16 %v777
    %v1550 = vunpack.c.h.b16 %v777
    %v1551 = vunpack.c.l.b16 %v778
    %v1552 = vunpack.c.h.b16 %v778
    %v1553 = vunpack.c.l.b16 %v779
    %v1554 = vunpack.c.h.b16 %v779
    %v1555 = vunpack.c.l.b16 %v780
    %v1556 = vunpack.c.h.b16 %v780
    %v1557 = vunpack.c.l.b16 %v781
    %v1558 = vunpack.c.h.b16 %v781
    %v1559 = vunpack.c.l.b16 %v782
    %v1560 = vunpack.c.h.b16 %v782
    %v1561 = vunpack.c.l.b16 %v783
    %v1562 = vunpack.c.h.b16 %v783
    %v1563 = vunpack.c.l.b16 %v784
    %v1564 = vunpack.c.h.b16 %v784
    %v1565 = vunpack.c.l.b16 %v785
    %v1566 = vunpack.c.h.b16 %v785
    %v1567 = vunpack.c.l.b16 %v786
    %v1568 = vunpack.c.h.b16 %v786
    %v1569 = vunpack.c.l.b16 %v787
    %v1570 = vunpack.c.h.b16 %v787
    %v1571 = vunpack.c.l.b16 %v788
    %v1572 = vunpack.c.h.b16 %v788
    %v1573 = vunpack.c.l.b16 %v789
    %v1574 = vunpack.c.h.b16 %v789
    %v1575 = vunpack.c.l.b16 %v790
    %v1576 = vunpack.c.h.b16 %v790
    %v1577 = vunpack.c.l.b16 %v791
    %v1578 = vunpack.c.h.b16 %v791
    %v1579 = vunpack.c.l.b16 %v792
    %v1580 = vunpack.c.h.b16 %v792
    %v1581 = vunpack.c.l.b16 %v793
    %v1582 = vunpack.c.h.b16 %v793
    %v1583 = vunpack.c.l.b16 %v794
    %v1584 = vunpack.c.h.b16 %v794
    %v1585 = vunpack.c.l.b16 %v795
    %v1586 = vunpack.c.h.b16 %v795
    %v1587 = vunpack.c.l.b16 %v796
    %v1588 = vunpack.c.h.b16 %v796
    %v1589 = vunpack.c.l.b16 %v797
    %v1590 = vunpack.c.h.b16 %v797
    %v1591 = vunpack.c.l.b16 %v798
    %v1592 = vunpack.c.h.b16 %v798
    %v1593 = vunpack.c.l.b16 %v799
    %v1594 = vunpack.c.h.b16 %v799
    %v1595 = vunpack.c.l.b16 %v800
    %v1596 = vunpack.c.h.b16 %v800
    %v1597 = vunpack.c.l.b16 %v801
    %v1598 = vunpack.c.h.b16 %v801
    %v1599 = vunpack.c.l.b16 %v802
    %v1600 = vunpack.c.h.b16 %v802
    %v1601 = vunpack.c.l.b16 %v803
    %v1602 = vunpack.c.h.b16 %v803
    %v1603 = vunpack.c.l.b16 %v804
    %v1604 = vunpack.c.h.b16 %v804
    %v1605 = vunpack.c.l.b16 %v805
    %v1606 = vunpack.c.h.b16 %v805
    %v1607 = vunpack.c.l.b16 %v806
    %v1608 = vunpack.c.h.b16 %v806
    %v1609 = vunpack.c.l.b16 %v807
    %v1610 = vunpack.c.h.b16 %v807
    %v1611 = vunpack.c.l.b16 %v808
    %v1612 = vunpack.c.h.b16 %v808
    %v1613 = vunpack.c.l.b16 %v809
    %v1614 = vunpack.c.h.b16 %v809
    %v1615 = vunpack.c.l.b16 %v810
    %v1616 = vunpack.c.h.b16 %v810
    %v1617 = vunpack.c.l.b16 %v811
    %v1618 = vunpack.c.h.b16 %v811
    %v1619 = vunpack.c.l.b16 %v812
    %v1620 = vunpack.c.h.b16 %v812
    %v1621 = vunpack.c.l.b16 %v813
    %v1622 = vunpack.c.h.b16 %v813
    %v1623 = vunpack.c.l.b16 %v814
    %v1624 = vunpack.c.h.b16 %v814
    %v1625 = vunpack.c.l.b16 %v815
    %v1626 = vunpack.c.h.b16 %v815
    %v1627 = vunpack.c.l.b16 %v816
    %v1628 = vunpack.c.h.b16 %v816
    %v1629 = vunpack.c.l.b16 %v817
    %v1630 = vunpack.c.h.b16 %v817
    %v1631 = vunpack.c.l.b16 %v818
    %v1632 = vunpack.c.h.b16 %v818
    %v1633 = vunpack.c.l.b16 %v819
    %v1634 = vunpack.c.h.b16 %v819
    %v1635 = vunpack.c.l.b16 %v820
    %v1636 = vunpack.c.h.b16 %v820
    %v1637 = vunpack.c.l.b16 %v821
    %v1638 = vunpack.c.h.b16 %v821
    %v1639 = vunpack.c.l.b16 %v822
    %v1640 = vunpack.c.h.b16 %v822
    %v1641 = vunpack.c.l.b16 %v823
    %v1642 = vunpack.c.h.b16 %v823
    %v1643 = vunpack.c.l.b16 %v824
    %v1644 = vunpack.c.h.b16 %v824
    %v1645 = vunpack.c.l.b16 %v825
    %v1646 = vunpack.c.h.b16 %v825
    %v1647 = vunpack.c.l.b16 %v826
    %v1648 = vunpack.c.h.b16 %v826
    %v1649 = vunpack.c.l.b16 %v827
    %v1650 = vunpack.c.h.b16 %v827
    %v1651 = vunpack.c.l.b16 %v828
    %v1652 = vunpack.c.h.b16 %v828
    %v1653 = vunpack.c.l.b16 %v829
    %v1654 = vunpack.c.h.b16 %v829
    %v1655 = vunpack.c.l.b16 %v830
    %v1656 = vunpack.c.h.b16 %v830
    %v1657 = vunpack.c.l.b16 %v831
    %v1658 = vunpack.c.h.b16 %v831
    %v1659 = vunpack.c.l.b16 %v832
    %v1660 = vunpack.c.h.b16 %v832
    %v1661 = vunpack.c.l.b16 %v833
    %v1662 = vunpack.c.h.b16 %v833
    %v1663 = vunpack.c.l.b16 %v834
    %v1664 = vunpack.c.h.b16 %v834
    %v1665 = vunpack.c.l.b16 %v835
    %v1666 = vunpack.c.h.b16 %v835
    %v1667 = vunpack.c.l.b16 %v836
    %v1668 = vunpack.c.h.b16 %v836
    %v1669 = vunpack.c.l.b16 %v837
    %v1670 = vunpack.c.h.b16 %v837
    %v1671 = vunpack.c.l.b16 %v838
    %v1672 = vunpack.c.h.b16 %v838
    %v1673 = vunpack.c.l.b16 %v839
    %v1674 = vunpack.c.h.b16 %v839
    %v1675 = vunpack.c.l.b16 %v840
    %v1676 = vunpack.c.h.b16 %v840
    %v1677 = vunpack.c.l.b16 %v841
    %v1678 = vunpack.c.h.b16 %v841
    %v1679 = vunpack.c.l.b16 %v842
    %v1680 = vunpack.c.h.b16 %v842
    %v1681 = vunpack.c.l.b16 %v843
    %v1682 = vunpack.c.h.b16 %v843
    %v1683 = vunpack.c.l.b16 %v844
    %v1684 = vunpack.c.h.b16 %v844
    %v1685 = vunpack.c.l.b16 %v845
    %v1686 = vunpack.c.h.b16 %v845
    %v1687 = vunpack.c.l.b16 %v846
    %v1688 = vunpack.c.h.b16 %v846
    %v1689 = vunpack.c.l.b16 %v847
    %v1690 = vunpack.c.h.b16 %v847
    %v1691 = vunpack.c.l.b16 %v848
    %v1692 = vunpack.c.h.b16 %v848
    %v1693 = vunpack.c.l.b16 %v849
    %v1694 = vunpack.c.h.b16 %v849
    %v1695 = vunpack.c.l.b16 %v850
    %v1696 = vunpack.c.h.b16 %v850
    %v1697 = vunpack.c.l.b16 %v851
    %v1698 = vunpack.c.h.b16 %v851
    %v1699 = vunpack.c.l.b16 %v852
    %v1700 = vunpack.c.h.b16 %v852
    %v1701 = vunpack.c.l.b16 %v853
    %v1702 = vunpack.c.h.b16 %v853
    %v1703 = vunpack.c.l.b16 %v854
    %v1704 = vunpack.c.h.b16 %v854
    %v1705 = vunpack.c.l.b16 %v855
    %v1706 = vunpack.c.h.b16 %v855
    %v1707 = vunpack.c.l.b16 %v856
    %v1708 = vunpack.c.h.b16 %v856
    %v1709 = vunpack.c.l.b16 %v857
    %v1710 = vunpack.c.h.b16 %v857
    %v1711 = vunpack.c.l.b16 %v858
    %v1712 = vunpack.c.h.b16 %v858
    %v1713 = vunpack.c.l.b16 %v859
    %v1714 = vunpack.c.h.b16 %v859
    %v1715 = vunpack.c.l.b16 %v860
    %v1716 = vunpack.c.h.b16 %v860
    %v1717 = vunpack.c.l.b16 %v861
    %v1718 = vunpack.c.h.b16 %v861
    %v1719 = vunpack.c.l.b16 %v862
    %v1720 = vunpack.c.h.b16 %v862
    %v1721 = vunpack.c.l.b16 %v863
    %v1722 = vunpack.c.h.b16 %v863
    %v1723 = vunpack.c.l.b16 %v864
    %v1724 = vunpack.c.h.b16 %v864
    %v1725 = vunpack.c.l.b16 %v865
    %v1726 = vunpack.c.h.b16 %v865
    %v1727 = vunpack.c.l.b16 %v866
    %v1728 = vunpack.c.h.b16 %v866
    %v1729 = vunpack.c.l.b16 %v867
    %v1730 = vunpack.c.h.b16 %v867
    %v1731 = vunpack.c.l.b16 %v868
    %v1732 = vunpack.c.h.b16 %v868
    %v1733 = vunpack.c.l.b16 %v869
    %v1734 = vunpack.c.h.b16 %v869
    %v1735 = vunpack.c.l.b16 %v870
    %v1736 = vunpack.c.h.b16 %v870
    %v1737 = vunpack.c.l.b16 %v871
    %v1738 = vunpack.c.h.b16 %v871
    %v1739 = vunpack.c.l.b16 %v872
    %v1740 = vunpack.c.h.b16 %v872
    %v1741 = vunpack.c.l.b16 %v873
    %v1742 = vunpack.c.h.b16 %v873
    %v1743 = vunpack.c.l.b16 %v874
    %v1744 = vunpack.c.h.b16 %v874
    %v1745 = vunpack.c.l.b16 %v875
    %v1746 = vunpack.c.h.b16 %v875
    %v1747 = vunpack.c.l.b16 %v876
    %v1748 = vunpack.c.h.b16 %v876
    %v1749 = vunpack.c.l.b16 %v877
    %v1750 = vunpack.c.h.b16 %v877
    %v1751 = vunpack.c.l.b16 %v878
    %v1752 = vunpack.c.h.b16 %v878
    %v1753 = vunpack.c.l.b16 %v879
    %v1754 = vunpack.c.h.b16 %v879
    %v1755 = vunpack.c.l.b16 %v880
    %v1756 = vunpack.c.h.b16 %v880
    %v1757 = vunpack.c.l.b16 %v881
    %v1758 = vunpack.c.h.b16 %v881
    %v1759 = vunpack.c.l.b16 %v882
    %v1760 = vunpack.c.h.b16 %v882
    %v1761 = vunpack.c.l.b16 %v883
    %v1762 = vunpack.c.h.b16 %v883
    %v1763 = vunpack.c.l.b16 %v884
    %v1764 = vunpack.c.h.b16 %v884
    %v1765 = vunpack.c.l.b16 %v885
    %v1766 = vunpack.c.h.b16 %v885
    %v1767 = vunpack.c.l.b16 %v886
    %v1768 = vunpack.c.h.b16 %v886
    %v1769 = vunpack.c.l.b16 %v887
    %v1770 = vunpack.c.h.b16 %v887
    %v1771 = vunpack.c.l.b16 %v888
    %v1772 = vunpack.c.h.b16 %v888
    %v1773 = vunpack.c.l.b16 %v889
    %v1774 = vunpack.c.h.b16 %v889
    %v1775 = vunpack.c.l.b16 %v890
    %v1776 = vunpack.c.h.b16 %v890
    %v1777 = vunpack.c.l.b16 %v891
    %v1778 = vunpack.c.h.b16 %v891
    %v1779 = vunpack.c.l.b16 %v892
    %v1780 = vunpack.c.h.b16 %v892
    %v1781 = vunpack.c.l.b16 %v893
    %v1782 = vunpack.c.h.b16 %v893
    %v1783 = vunpack.c.l.b16 %v894
    %v1784 = vunpack.c.h.b16 %v894
    %v1785 = vunpack.c.l.b16 %v895
    %v1786 = vunpack.c.h.b16 %v895
    %v1787 = vunpack.c.l.b16 %v896
    %v1788 = vunpack.c.h.b16 %v896
    %v1789 = vunpack.c.l.b16 %v897
    %v1790 = vunpack.c.h.b16 %v897
    %v1791 = vunpack.c.l.b16 %v898
    %v1792 = vunpack.c.h.b16 %v898
    %v1793 = vunpack.c.l.b16 %v899
    %v1794 = vunpack.c.h.b16 %v899
    %v1795 = vunpack.c.l.b16 %v900
    %v1796 = vunpack.c.h.b16 %v900
    %v1797 = vpack.c.b16 %v1227, %v1221
    %v1798 = vpack.c.b16 %v1228, %v1222
    %v1799 = vpack.c.b16 %v1229, %v1223
    %v1800 = vpack.c.b16 %v1230, %v1224
    %v1801 = vpack.c.b16 %v1231, %v1225
    %v1802 = vpack.c.b16 %v1232, %v1226
    %v1803 = vpack.c.b16 %v1239, %v1233
    %v1804 = vpack.c.b16 %v1240, %v1234
    %v1805 = vpack.c.b16 %v1241, %v1235
    %v1806 = vpack.c.b16 %v1242, %v1236
    %v1807 = vpack.c.b16 %v1243, %v1237
    %v1808 = vpack.c.b16 %v1244, %v1238
    %v1809 = vpack.c.b16 %v1251, %v1245
    %v1810 = vpack.c.b16 %v1252, %v1246
    %v1811 = vpack.c.b16 %v1253, %v1247
    %v1812 = vpack.c.b16 %v1254, %v1248
    %v1813 = vpack.c.b16 %v1255, %v1249
    %v1814 = vpack.c.b16 %v1256, %v1250
    %v1815 = vpack.c.b16 %v1263, %v1257
    %v1816 = vpack.c.b16 %v1264, %v1258
    %v1817 = vpack.c.b16 %v1265, %v1259
    %v1818 = vpack.c.b16 %v1266, %v1260
    %v1819 = vpack.c.b16 %v1267, %v1261
    %v1820 = vpack.c.b16 %v1268, %v1262
    %v1821 = vpack.c.b16 %v1275, %v1269
    %v1822 = vpack.c.b16 %v1276, %v1270
    %v1823 = vpack.c.b16 %v1277, %v1271
    %v1824 = vpack.c.b16 %v1278, %v1272
    %v1825 = vpack.c.b16 %v1279, %v1273
    %v1826 = vpack.c.b16 %v1280, %v1274
    %v1827 = vpack.c.b16 %v1287, %v1281
    %v1828 = vpack.c.b16 %v1288, %v1282
    %v1829 = vpack.c.b16 %v1289, %v1283
    %v1830 = vpack.c.b16 %v1290, %v1284
    %v1831 = vpack.c.b16 %v1291, %v1285
    %v1832 = vpack.c.b16 %v1292, %v1286
    %v1833 = vpack.c.b16 %v1299, %v1293
    %v1834 = vpack.c.b16 %v1300, %v1294
    %v1835 = vpack.c.b16 %v1301, %v1295
    %v1836 = vpack.c.b16 %v1302, %v1296
    %v1837 = vpack.c.b16 %v1303, %v1297
    %v1838 = vpack.c.b16 %v1304, %v1298
    %v1839 = vpack.c.b16 %v1311, %v1305
    %v1840 = vpack.c.b16 %v1312, %v1306
    %v1841 = vpack.c.b16 %v1313, %v1307
    %v1842 = vpack.c.b16 %v1314, %v1308
    %v1843 = vpack.c.b16 %v1315, %v1309
    %v1844 = vpack.c.b16 %v1316, %v1310
    %v1845 = vpack.c.b16 %v1323, %v1317
    %v1846 = vpack.c.b16 %v1324, %v1318
    %v1847 = vpack.c.b16 %v1325, %v1319
    %v1848 = vpack.c.b16 %v1326, %v1320
    %v1849 = vpack.c.b16 %v1327, %v1321
    %v1850 = vpack.c.b16 %v1328, %v1322
    %v1851 = vpack.c.b16 %v1335, %v1329
    %v1852 = vpack.c.b16 %v1336, %v1330
    %v1853 = vpack.c.b16 %v1337, %v1331
    %v1854 = vpack.c.b16 %v1338, %v1332
    %v1855 = vpack.c.b16 %v1339, %v1333
    %v1856 = vpack.c.b16 %v1340, %v1334
    %v1857 = vpack.c.b16 %v1347, %v1341
    %v1858 = vpack.c.b16 %v1348, %v1342
    %v1859 = vpack.c.b16 %v1349, %v1343
    %v1860 = vpack.c.b16 %v1350, %v1344
    %v1861 = vpack.c.b16 %v1351, %v1345
    %v1862 = vpack.c.b16 %v1352, %v1346
    %v1863 = vpack.c.b16 %v1359, %v1353
    %v1864 = vpack.c.b16 %v1360, %v1354
    %v1865 = vpack.c.b16 %v1361, %v1355
    %v1866 = vpack.c.b16 %v1362, %v1356
    %v1867 = vpack.c.b16 %v1363, %v1357
    %v1868 = vpack.c.b16 %v1364, %v1358
    %v1869 = vpack.c.b16 %v1371, %v1365
    %v1870 = vpack.c.b16 %v1372, %v1366
    %v1871 = vpack.c.b16 %v1373, %v1367
    %v1872 = vpack.c.b16 %v1374, %v1368
    %v1873 = vpack.c.b16 %v1375, %v1369
    %v1874 = vpack.c.b16 %v1376, %v1370
    %v1875 = vpack.c.b16 %v1383, %v1377
    %v1876 = vpack.c.b16 %v1384, %v1378
    %v1877 = vpack.c.b16 %v1385, %v1379
    %v1878 = vpack.c.b16 %v1386, %v1380
    %v1879 = vpack.c.b16 %v1387, %v1381
    %v1880 = vpack.c.b16 %v1388, %v1382
    %v1881 = vpack.c.b16 %v1395, %v1389
    %v1882 = vpack.c.b16 %v1396, %v1390
    %v1883 = vpack.c.b16 %v1397, %v1391
    %v1884 = vpack.c.b16 %v1398, %v1392
    %v1885 = vpack.c.b16 %v1399, %v1393
    %v1886 = vpack.c.b16 %v1400, %v1394
    %v1887 = vpack.c.b16 %v1407, %v1401
    %v1888 = vpack.c.b16 %v1408, %v1402
    %v1889 = vpack.c.b16 %v1409, %v1403
    %v1890 = vpack.c.b16 %v1410, %v1404
    %v1891 = vpack.c.b16 %v1411, %v1405
    %v1892 = vpack.c.b16 %v1412, %v1406
    %v1893 = vpack.c.b16 %v1419, %v1413
    %v1894 = vpack.c.b16 %v1420, %v1414
    %v1895 = vpack.c.b16 %v1421, %v1415
    %v1896 = vpack.c.b16 %v1422, %v1416
    %v1897 = vpack.c.b16 %v1423, %v1417
    %v1898 = vpack.c.b16 %v1424, %v1418
    %v1899 = vpack.c.b16 %v1431, %v1425
    %v1900 = vpack.c.b16 %v1432, %v1426
    %v1901 = vpack.c.b16 %v1433, %v1427
    %v1902 = vpack.c.b16 %v1434, %v1428
    %v1903 = vpack.c.b16 %v1435, %v1429
    %v1904 = vpack.c.b16 %v1436, %v1430
    %v1905 = vpack.c.b16 %v1443, %v1437
    %v1906 = vpack.c.b16 %v1444, %v1438
    %v1907 = vpack.c.b16 %v1445, %v1439
    %v1908 = vpack.c.b16 %v1446, %v1440
    %v1909 = vpack.c.b16 %v1447, %v1441
    %v1910 = vpack.c.b16 %v1448, %v1442
    %v1911 = vpack.c.b16 %v1455, %v1449
    %v1912 = vpack.c.b16 %v1456, %v1450
    %v1913 = vpack.c.b16 %v1457, %v1451
    %v1914 = vpack.c.b16 %v1458, %v1452
    %v1915 = vpack.c.b16 %v1459, %v1453
    %v1916 = vpack.c.b16 %v1460, %v1454
    %v1917 = vpack.c.b16 %v1467, %v1461
    %v1918 = vpack.c.b16 %v1468, %v1462
    %v1919 = vpack.c.b16 %v1469, %v1463
    %v1920 = vpack.c.b16 %v1470, %v1464
    %v1921 = vpack.c.b16 %v1471, %v1465
    %v1922 = vpack.c.b16 %v1472, %v1466
    %v1923 = vpack.c.b16 %v1479, %v1473
    %v1924 = vpack.c.b16 %v1480, %v1474
    %v1925 = vpack.c.b16 %v1481, %v1475
    %v1926 = vpack.c.b16 %v1482, %v1476
    %v1927 = vpack.c.b16 %v1483, %v1477
    %v1928 = vpack.c.b16 %v1484, %v1478
    %v1929 = vpack.c.b16 %v1491, %v1485
    %v1930 = vpack.c.b16 %v1492, %v1486
    %v1931 = vpack.c.b16 %v1493, %v1487
    %v1932 = vpack.c.b16 %v1494, %v1488
    %v1933 = vpack.c.b16 %v1495, %v1489
    %v1934 = vpack.c.b16 %v1496, %v1490
    %v1935 = vpack.c.b16 %v1503, %v1497
    %v1936 = vpack.c.b16 %v1504, %v1498
    %v1937 = vpack.c.b16 %v1505, %v1499
    %v1938 = vpack.c.b16 %v1506, %v1500
    %v1939 = vpack.c.b16 %v1507, %v1501
    %v1940 = vpack.c.b16 %v1508, %v1502
    %v1941 = vpack.c.b16 %v1515, %v1509
    %v1942 = vpack.c.b16 %v1516, %v1510
    %v1943 = vpack.c.b16 %v1517, %v1511
    %v1944 = vpack.c.b16 %v1518, %v1512
    %v1945 = vpack.c.b16 %v1519, %v1513
    %v1946 = vpack.c.b16 %v1520, %v1514
    %v1947 = vpack.c.b16 %v1527, %v1521
    %v1948 = vpack.c.b16 %v1528, %v1522
    %v1949 = vpack.c.b16 %v1529, %v1523
    %v1950 = vpack.c.b16 %v1530, %v1524
    %v1951 = vpack.c.b16 %v1531, %v1525
    %v1952 = vpack.c.b16 %v1532, %v1526
    %v1953 = vpack.c.b16 %v1539, %v1533
    %v1954 = vpack.c.b16 %v1540, %v1534
    %v1955 = vpack.c.b16 %v1541, %v1535
    %v1956 = vpack.c.b16 %v1542, %v1536
    %v1957 = vpack.c.b16 %v1543, %v1537
    %v1958 = vpack.c.b16 %v1544, %v1538
    %v1959 = vpack.c.b16 %v1551, %v1545
    %v1960 = vpack.c.b16 %v1552, %v1546
    %v1961 = vpack.c.b16 %v1553, %v1547
    %v1962 = vpack.c.b16 %v1554, %v1548
    %v1963 = vpack.c.b16 %v1555, %v1549
    %v1964 = vpack.c.b16 %v1556, %v1550
    %v1965 = vpack.c.b16 %v1563, %v1557
    %v1966 = vpack.c.b16 %v1564, %v1558
    %v1967 = vpack.c.b16 %v1565, %v1559
    %v1968 = vpack.c.b16 %v1566, %v1560
    %v1969 = vpack.c.b16 %v1567, %v1561
    %v1970 = vpack.c.b16 %v1568, %v1562
    %v1971 = vpack.c.b16 %v1575, %v1569
    %v1972 = vpack.c.b16 %v1576, %v1570
    %v1973 = vpack.c.b16 %v1577, %v1571
    %v1974 = vpack.c.b16 %v1578, %v1572
    %v1975 = vpack.c.b16 %v1579, %v1573
    %v1976 = vpack.c.b16 %v1580, %v1574
    %v1977 = vpack.c.b16 %v1587, %v1581
    %v1978 = vpack.c.b16 %v1588, %v1582
    %v1979 = vpack.c.b16 %v1589, %v1583
    %v1980 = vpack.c.b16 %v1590, %v1584
    %v1981 = vpack.c.b16 %v1591, %v1585
    %v1982 = vpack.c.b16 %v1592, %v1586
    %v1983 = vpack.c.b16 %v1599, %v1593
    %v1984 = vpack.c.b16 %v1600, %v1594
    %v1985 = vpack.c.b16 %v1601, %v1595
    %v1986 = vpack.c.b16 %v1602, %v1596
    %v1987 = vpack.c.b16 %v1603, %v1597
    %v1988 = vpack.c.b16 %v1604, %v1598
    %v1989 = vpack.c.b16 %v1611, %v1605
    %v1990 = vpack.c.b16 %v1612, %v1606
    %v1991 = vpack.c.b16 %v1613, %v1607
    %v1992 = vpack.c.b16 %v1614, %v1608
    %v1993 = vpack.c.b16 %v1615, %v1609
    %v1994 = vpack.c.b16 %v1616, %v1610
    %v1995 = vpack.c.b16 %v1623, %v1617
    %v1996 = vpack.c.b16 %v1624, %v1618
    %v1997 = vpack.c.b16 %v1625, %v1619
    %v1998 = vpack.c.b16 %v1626, %v1620
    %v1999 = vpack.c.b16 %v1627, %v1621
    %v2000 = vpack.c.b16 %v1628, %v1622
    %v2001 = vpack.c.b16 %v1635, %v1629
    %v2002 = vpack.c.b16 %v1636, %v1630
    %v2003 = vpack.c.b16 %v1637, %v1631
    %v2004 = vpack.c.b16 %v1638, %v1632
    %v2005 = vpack.c.b16 %v1639, %v1633
    %v2006 = vpack.c.b16 %v1640, %v1634
    %v2007 = vpack.c.b16 %v1647, %v1641
    %v2008 = vpack.c.b16 %v1648, %v1642
    %v2009 = vpack.c.b16 %v1649, %v1643
    %v2010 = vpack.c.b16 %v1650, %v1644
    %v2011 = vpack.c.b16 %v1651, %v1645
    %v2012 = vpack.c.b16 %v1652, %v1646
    %v2013 = vpack.c.b16 %v1659, %v1653
    %v2014 = vpack.c.b16 %v1660, %v1654
    %v2015 = vpack.c.b16 %v1661, %v1655
    %v2016 = vpack.c.b16 %v1662, %v1656
    %v2017 = vpack.c.b16 %v1663, %v1657
    %v2018 = vpack.c.b16 %v1664, %v1658
    %v2019 = vpack.c.b16 %v1671, %v1665
    %v2020 = vpack.c.b16 %v1672, %v1666
    %v2021 = vpack.c.b16 %v1673, %v1667
    %v2022 = vpack.c.b16 %v1674, %v1668
    %v2023 = vpack.c.b16 %v1675, %v1669
    %v2024 = vpack.c.b16 %v1676, %v1670
    %v2025 = vpack.c.b16 %v1683, %v1677
    %v2026 = vpack.c.b16 %v1684, %v1678
    %v2027 = vpack.c.b16 %v1685, %v1679
    %v2028 = vpack.c.b16 %v1686, %v1680
    %v2029 = vpack.c.b16 %v1687, %v1681
    %v2030 = vpack.c.b16 %v1688, %v1682
    %v2031 = vpack.c.b16 %v1695, %v1689
    %v2032 = vpack.c.b16 %v1696, %v1690
    %v2033 = vpack.c.b16 %v1697, %v1691
    %v2034 = vpack.c.b16 %v1698, %v1692
    %v2035 = vpack.c.b16 %v1699, %v1693
    %v2036 = vpack.c.b16 %v1700, %v1694
    %v2037 = vpack.c.b16 %v1707, %v1701
    %v2038 = vpack.c.b16 %v1708, %v1702
    %v2039 = vpack.c.b16 %v1709, %v1703
    %v2040 = vpack.c.b16 %v1710, %v1704
    %v2041 = vpack.c.b16 %v1711, %v1705
    %v2042 = vpack.c.b16 %v1712, %v1706
    %v2043 = vpack.c.b16 %v1719, %v1713
    %v2044 = vpack.c.b16 %v1720, %v1714
    %v2045 = vpack.c.b16 %v1721, %v1715
    %v2046 = vpack.c.b16 %v1722, %v1716
    %v2047 = vpack.c.b16 %v1723, %v1717
    %v2048 = vpack.c.b16 %v1724, %v1718
    %v2049 = vpack.c.b16 %v1731, %v1725
    %v2050 = vpack.c.b16 %v1732, %v1726
    %v2051 = vpack.c.b16 %v1733, %v1727
    %v2052 = vpack.c.b16 %v1734, %v1728
    %v2053 = vpack.c.b16 %v1735, %v1729
    %v2054 = vpack.c.b16 %v1736, %v1730
    %v2055 = vpack.c.b16 %v1743, %v1737
    %v2056 = vpack.c.b16 %v1744, %v1738
    %v2057 = vpack.c.b16 %v1745, %v1739
    %v2058 = vpack.c.b16 %v1746, %v1740
    %v2059 = vpack.c.b16 %v1747, %v1741
    %v2060 = vpack.c.b16 %v1748, %v1742
    %v2061 = vpack.c.b16 %v1755, %v1749
    %v2062 = vpack.c.b16 %v1756, %v1750
    %v2063 = vpack.c.b16 %v1757, %v1751
    %v2064 = vpack.c.b16 %v1758, %v1752
    %v2065 = vpack.c.b16 %v1759, %v1753
    %v2066 = vpack.c.b16 %v1760, %v1754
    %v2067 = vpack.c.b16 %v1767, %v1761
    %v2068 = vpack.c.b16 %v1768, %v1762
    %v2069 = vpack.c.b16 %v1769, %v1763
    %v2070 = vpack.c.b16 %v1770, %v1764
    %v2071 = vpack.c.b16 %v1771, %v1765
    %v2072 = vpack.c.b16 %v1772, %v1766
    %v2073 = vpack.c.b16 %v1779, %v1773
    %v2074 = vpack.c.b16 %v1780, %v1774
    %v2075 = vpack.c.b16 %v1781, %v1775
    %v2076 = vpack.c.b16 %v1782, %v1776
    %v2077 = vpack.c.b16 %v1783, %v1777
    %v2078 = vpack.c.b16 %v1784, %v1778
    %v2079 = vpack.c.b16 %v1791, %v1785
    %v2080 = vpack.c.b16 %v1792, %v1786
    %v2081 = vpack.c.b16 %v1793, %v1787
    %v2082 = vpack.c.b16 %v1794, %v1788
    %v2083 = vpack.c.b16 %v1795, %v1789
    %v2084 = vpack.c.b16 %v1796, %v1790
    %2373 = vmatprep.subr.bf16.mxu0 %v1798
    %2374 = vmatpush1.bf16.msra.mxu0 %v1797
    %2375 = vmatprep.subr.bf16.mxu0 %v1804
    %2376 = vmatpush1.bf16.msra.mxu0 %v1803
    %2377 = vmatprep.subr.bf16.mxu0 %v1810
    %2378 = vmatpush1.bf16.msra.mxu0 %v1809
    %2379 = vmatprep.subr.bf16.mxu0 %v1816
    %2380 = vmatpush1.bf16.msra.mxu0 %v1815
    %2381 = vmatprep.subr.bf16.mxu0 %v1822
    %2382 = vmatpush1.bf16.msra.mxu0 %v1821
    %2383 = vmatprep.subr.bf16.mxu0 %v1828
    %2384 = vmatpush1.bf16.msra.mxu0 %v1827
    %2385 = vmatprep.subr.bf16.mxu0 %v1834
    %2386 = vmatpush1.bf16.msra.mxu0 %v1833
    %2387 = vmatprep.subr.bf16.mxu0 %v1840
    %2388 = vmatpush1.bf16.msra.mxu0 %v1839
    %2389 = vmatprep.subr.bf16.mxu0 %v1846
    %2390 = vmatpush1.bf16.msra.mxu0 %v1845
    %2391 = vmatprep.subr.bf16.mxu0 %v1852
    %2392 = vmatpush1.bf16.msra.mxu0 %v1851
    %2393 = vmatprep.subr.bf16.mxu0 %v1858
    %2394 = vmatpush1.bf16.msra.mxu0 %v1857
    %2395 = vmatprep.subr.bf16.mxu0 %v1864
    %2396 = vmatpush1.bf16.msra.mxu0 %v1863
    %2397 = vmatprep.subr.bf16.mxu0 %v1870
    %2398 = vmatpush1.bf16.msra.mxu0 %v1869
    %2399 = vmatprep.subr.bf16.mxu0 %v1876
    %2400 = vmatpush1.bf16.msra.mxu0 %v1875
    %2401 = vmatprep.subr.bf16.mxu0 %v1882
    %2402 = vmatpush1.bf16.msra.mxu0 %v1881
    %2403 = vmatprep.subr.bf16.mxu0 %v1888
    %2404 = vmatpush1.bf16.msra.mxu0 %v1887
    %2405 = vmatprep.mubr.bf16.mxu0 %v608
    %2406 = vmatmul.mubr.bf16.gmra.mrb[0].mxu0 %v607
    %v2407 = vpop.f32.mrb[0].mxu0
    %v2408 = vadd.f32 %v906, %v2407
    %v2409 = vpop.f32.mrb[0].mxu0
    %v2410 = vadd.f32 %v910, %v2409
    %v2411 = vpop.f32.mrb[0].mxu0
    %v2412 = vpop.f32.mrb[0].mxu0
    %2413 = vdwg.mxu0
    %2414 = vmatprep.subr.bf16.mxu0 %v1894
    %2415 = vmatpush1.bf16.msra.mxu0 %v1893
    %2416 = vmatprep.subr.bf16.mxu0 %v1900
    %2417 = vmatpush1.bf16.msra.mxu0 %v1899
    %2418 = vmatprep.subr.bf16.mxu0 %v1906
    %2419 = vmatpush1.bf16.msra.mxu0 %v1905
    %2420 = vmatprep.subr.bf16.mxu0 %v1912
    %2421 = vmatpush1.bf16.msra.mxu0 %v1911
    %2422 = vmatprep.subr.bf16.mxu0 %v1918
    %2423 = vmatpush1.bf16.msra.mxu0 %v1917
    %2424 = vmatprep.subr.bf16.mxu0 %v1924
    %2425 = vmatpush1.bf16.msra.mxu0 %v1923
    %2426 = vmatprep.subr.bf16.mxu0 %v1930
    %2427 = vmatpush1.bf16.msra.mxu0 %v1929
    %2428 = vmatprep.subr.bf16.mxu0 %v1936
    %2429 = vmatpush1.bf16.msra.mxu0 %v1935
    %2430 = vmatprep.subr.bf16.mxu0 %v1942
    %2431 = vmatpush1.bf16.msra.mxu0 %v1941
    %2432 = vmatprep.subr.bf16.mxu0 %v1948
    %2433 = vmatpush1.bf16.msra.mxu0 %v1947
    %2434 = vmatprep.subr.bf16.mxu0 %v1954
    %2435 = vmatpush1.bf16.msra.mxu0 %v1953
    %2436 = vmatprep.subr.bf16.mxu0 %v1960
    %2437 = vmatpush1.bf16.msra.mxu0 %v1959
    %2438 = vmatprep.subr.bf16.mxu0 %v1966
    %2439 = vmatpush1.bf16.msra.mxu0 %v1965
    %2440 = vmatprep.subr.bf16.mxu0 %v1972
    %2441 = vmatpush1.bf16.msra.mxu0 %v1971
    %2442 = vmatprep.subr.bf16.mxu0 %v1978
    %2443 = vmatpush1.bf16.msra.mxu0 %v1977
    %2444 = vmatprep.subr.bf16.mxu0 %v1984
    %2445 = vmatpush1.bf16.msra.mxu0 %v1983
    %2446 = vmatprep.mubr.bf16.mxu0 %v610
    %2447 = vmatmul.mubr.bf16.gmra.mrb[0].mxu0 %v609
    %v2448 = vpop.f32.mrb[0].mxu0
    %v2449 = vadd.f32 %v2408, %v2448
    %v2450 = vpop.f32.mrb[0].mxu0
    %v2451 = vadd.f32 %v2410, %v2450
    %v2452 = vpop.f32.mrb[0].mxu0
    %v2453 = vpop.f32.mrb[0].mxu0
    %2454 = vdwg.mxu0
    %2455 = vmatprep.subr.bf16.mxu0 %v1990
    %2456 = vmatpush1.bf16.msra.mxu0 %v1989
    %2457 = vmatprep.subr.bf16.mxu0 %v1996
    %2458 = vmatpush1.bf16.msra.mxu0 %v1995
    %2459 = vmatprep.subr.bf16.mxu0 %v2002
    %2460 = vmatpush1.bf16.msra.mxu0 %v2001
    %2461 = vmatprep.subr.bf16.mxu0 %v2008
    %2462 = vmatpush1.bf16.msra.mxu0 %v2007
    %2463 = vmatprep.subr.bf16.mxu0 %v2014
    %2464 = vmatpush1.bf16.msra.mxu0 %v2013
    %2465 = vmatprep.subr.bf16.mxu0 %v2020
    %2466 = vmatpush1.bf16.msra.mxu0 %v2019
    %2467 = vmatprep.subr.bf16.mxu0 %v2026
    %2468 = vmatpush1.bf16.msra.mxu0 %v2025
    %2469 = vmatprep.subr.bf16.mxu0 %v2032
    %2470 = vmatpush1.bf16.msra.mxu0 %v2031
    %2471 = vmatprep.subr.bf16.mxu0 %v2038
    %2472 = vmatpush1.bf16.msra.mxu0 %v2037
    %2473 = vmatprep.subr.bf16.mxu0 %v2044
    %2474 = vmatpush1.bf16.msra.mxu0 %v2043
    %2475 = vmatprep.subr.bf16.mxu0 %v2050
    %2476 = vmatpush1.bf16.msra.mxu0 %v2049
    %2477 = vmatprep.subr.bf16.mxu0 %v2056
    %2478 = vmatpush1.bf16.msra.mxu0 %v2055
    %2479 = vmatprep.subr.bf16.mxu0 %v2062
    %2480 = vmatpush1.bf16.msra.mxu0 %v2061
    %2481 = vmatprep.subr.bf16.mxu0 %v2068
    %2482 = vmatpush1.bf16.msra.mxu0 %v2067
    %2483 = vmatprep.subr.bf16.mxu0 %v2074
    %2484 = vmatpush1.bf16.msra.mxu0 %v2073
    %2485 = vmatprep.subr.bf16.mxu0 %v2080
    %2486 = vmatpush1.bf16.msra.mxu0 %v2079
    %2487 = vmatprep.mubr.bf16.mxu0 %v612
    %2488 = vmatmul.mubr.bf16.gmra.mrb[0].mxu0 %v611
    %v2489 = vpop.f32.mrb[0].mxu0
    %v2490 = vadd.f32 %v2449, %v2489
    %v2491 = vpop.f32.mrb[0].mxu0
    %v2492 = vadd.f32 %v2451, %v2491
    %v2493 = vpop.f32.mrb[0].mxu0
    %v2494 = vpop.f32.mrb[0].mxu0
    %2495 = vdwg.mxu0
    %2496 = vmatprep.subr.bf16.mxu0 %v1800
    %2497 = vmatpush1.bf16.msra.mxu0 %v1799
    %2498 = vmatprep.subr.bf16.mxu0 %v1806
    %2499 = vmatpush1.bf16.msra.mxu0 %v1805
    %2500 = vmatprep.subr.bf16.mxu0 %v1812
    %2501 = vmatpush1.bf16.msra.mxu0 %v1811
    %2502 = vmatprep.subr.bf16.mxu0 %v1818
    %2503 = vmatpush1.bf16.msra.mxu0 %v1817
    %2504 = vmatprep.subr.bf16.mxu0 %v1824
    %2505 = vmatpush1.bf16.msra.mxu0 %v1823
    %2506 = vmatprep.subr.bf16.mxu0 %v1830
    %2507 = vmatpush1.bf16.msra.mxu0 %v1829
    %2508 = vmatprep.subr.bf16.mxu0 %v1836
    %2509 = vmatpush1.bf16.msra.mxu0 %v1835
    %2510 = vmatprep.subr.bf16.mxu0 %v1842
    %2511 = vmatpush1.bf16.msra.mxu0 %v1841
    %2512 = vmatprep.subr.bf16.mxu0 %v1848
    %2513 = vmatpush1.bf16.msra.mxu0 %v1847
    %2514 = vmatprep.subr.bf16.mxu0 %v1854
    %2515 = vmatpush1.bf16.msra.mxu0 %v1853
    %2516 = vmatprep.subr.bf16.mxu0 %v1860
    %2517 = vmatpush1.bf16.msra.mxu0 %v1859
    %2518 = vmatprep.subr.bf16.mxu0 %v1866
    %2519 = vmatpush1.bf16.msra.mxu0 %v1865
    %2520 = vmatprep.subr.bf16.mxu0 %v1872
    %2521 = vmatpush1.bf16.msra.mxu0 %v1871
    %2522 = vmatprep.subr.bf16.mxu0 %v1878
    %2523 = vmatpush1.bf16.msra.mxu0 %v1877
    %2524 = vmatprep.subr.bf16.mxu0 %v1884
    %2525 = vmatpush1.bf16.msra.mxu0 %v1883
    %2526 = vmatprep.subr.bf16.mxu0 %v1890
    %2527 = vmatpush1.bf16.msra.mxu0 %v1889
    %2528 = vmatprep.mubr.bf16.mxu0 %v608
    %2529 = vmatmul.mubr.bf16.gmra.mrb[0].mxu0 %v607
    %v2530 = vpop.f32.mrb[0].mxu0
    %v2531 = vadd.f32 %v914, %v2530
    %v2532 = vpop.f32.mrb[0].mxu0
    %v2533 = vadd.f32 %v918, %v2532
    %v2534 = vpop.f32.mrb[0].mxu0
    %v2535 = vpop.f32.mrb[0].mxu0
    %2536 = vdwg.mxu0
    %2537 = vmatprep.subr.bf16.mxu0 %v1896
    %2538 = vmatpush1.bf16.msra.mxu0 %v1895
    %2539 = vmatprep.subr.bf16.mxu0 %v1902
    %2540 = vmatpush1.bf16.msra.mxu0 %v1901
    %2541 = vmatprep.subr.bf16.mxu0 %v1908
    %2542 = vmatpush1.bf16.msra.mxu0 %v1907
    %2543 = vmatprep.subr.bf16.mxu0 %v1914
    %2544 = vmatpush1.bf16.msra.mxu0 %v1913
    %2545 = vmatprep.subr.bf16.mxu0 %v1920
    %2546 = vmatpush1.bf16.msra.mxu0 %v1919
    %2547 = vmatprep.subr.bf16.mxu0 %v1926
    %2548 = vmatpush1.bf16.msra.mxu0 %v1925
    %2549 = vmatprep.subr.bf16.mxu0 %v1932
    %2550 = vmatpush1.bf16.msra.mxu0 %v1931
    %2551 = vmatprep.subr.bf16.mxu0 %v1938
    %2552 = vmatpush1.bf16.msra.mxu0 %v1937
    %2553 = vmatprep.subr.bf16.mxu0 %v1944
    %2554 = vmatpush1.bf16.msra.mxu0 %v1943
    %2555 = vmatprep.subr.bf16.mxu0 %v1950
    %2556 = vmatpush1.bf16.msra.mxu0 %v1949
    %2557 = vmatprep.subr.bf16.mxu0 %v1956
    %2558 = vmatpush1.bf16.msra.mxu0 %v1955
    %2559 = vmatprep.subr.bf16.mxu0 %v1962
    %2560 = vmatpush1.bf16.msra.mxu0 %v1961
    %2561 = vmatprep.subr.bf16.mxu0 %v1968
    %2562 = vmatpush1.bf16.msra.mxu0 %v1967
    %2563 = vmatprep.subr.bf16.mxu0 %v1974
    %2564 = vmatpush1.bf16.msra.mxu0 %v1973
    %2565 = vmatprep.subr.bf16.mxu0 %v1980
    %2566 = vmatpush1.bf16.msra.mxu0 %v1979
    %2567 = vmatprep.subr.bf16.mxu0 %v1986
    %2568 = vmatpush1.bf16.msra.mxu0 %v1985
    %2569 = vmatprep.mubr.bf16.mxu0 %v610
    %2570 = vmatmul.mubr.bf16.gmra.mrb[0].mxu0 %v609
    %v2571 = vpop.f32.mrb[0].mxu0
    %v2572 = vadd.f32 %v2531, %v2571
    %v2573 = vpop.f32.mrb[0].mxu0
    %v2574 = vadd.f32 %v2533, %v2573
    %v2575 = vpop.f32.mrb[0].mxu0
    %v2576 = vpop.f32.mrb[0].mxu0
    %2577 = vdwg.mxu0
    %2578 = vmatprep.subr.bf16.mxu0 %v1992
    %2579 = vmatpush1.bf16.msra.mxu0 %v1991
    %2580 = vmatprep.subr.bf16.mxu0 %v1998
    %2581 = vmatpush1.bf16.msra.mxu0 %v1997
    %2582 = vmatprep.subr.bf16.mxu0 %v2004
    %2583 = vmatpush1.bf16.msra.mxu0 %v2003
    %2584 = vmatprep.subr.bf16.mxu0 %v2010
    %2585 = vmatpush1.bf16.msra.mxu0 %v2009
    %2586 = vmatprep.subr.bf16.mxu0 %v2016
    %2587 = vmatpush1.bf16.msra.mxu0 %v2015
    %2588 = vmatprep.subr.bf16.mxu0 %v2022
    %2589 = vmatpush1.bf16.msra.mxu0 %v2021
    %2590 = vmatprep.subr.bf16.mxu0 %v2028
    %2591 = vmatpush1.bf16.msra.mxu0 %v2027
    %2592 = vmatprep.subr.bf16.mxu0 %v2034
    %2593 = vmatpush1.bf16.msra.mxu0 %v2033
    %2594 = vmatprep.subr.bf16.mxu0 %v2040
    %2595 = vmatpush1.bf16.msra.mxu0 %v2039
    %2596 = vmatprep.subr.bf16.mxu0 %v2046
    %2597 = vmatpush1.bf16.msra.mxu0 %v2045
    %2598 = vmatprep.subr.bf16.mxu0 %v2052
    %2599 = vmatpush1.bf16.msra.mxu0 %v2051
    %2600 = vmatprep.subr.bf16.mxu0 %v2058
    %2601 = vmatpush1.bf16.msra.mxu0 %v2057
    %2602 = vmatprep.subr.bf16.mxu0 %v2064
    %2603 = vmatpush1.bf16.msra.mxu0 %v2063
    %2604 = vmatprep.subr.bf16.mxu0 %v2070
    %2605 = vmatpush1.bf16.msra.mxu0 %v2069
    %2606 = vmatprep.subr.bf16.mxu0 %v2076
    %2607 = vmatpush1.bf16.msra.mxu0 %v2075
    %2608 = vmatprep.subr.bf16.mxu0 %v2082
    %2609 = vmatpush1.bf16.msra.mxu0 %v2081
    %2610 = vmatprep.mubr.bf16.mxu0 %v612
    %2611 = vmatmul.mubr.bf16.gmra.mrb[0].mxu0 %v611
    %v2612 = vpop.f32.mrb[0].mxu0
    %v2613 = vadd.f32 %v2572, %v2612
    %v2614 = vpop.f32.mrb[0].mxu0
    %v2615 = vadd.f32 %v2574, %v2614
    %v2616 = vpop.f32.mrb[0].mxu0
    %v2617 = vpop.f32.mrb[0].mxu0
    %2618 = vdwg.mxu0
    %2619 = vmatprep.subr.bf16.mxu0 %v1802
    %2620 = vmatpush1.bf16.msra.mxu0 %v1801
    %2621 = vmatprep.subr.bf16.mxu0 %v1808
    %2622 = vmatpush1.bf16.msra.mxu0 %v1807
    %2623 = vmatprep.subr.bf16.mxu0 %v1814
    %2624 = vmatpush1.bf16.msra.mxu0 %v1813
    %2625 = vmatprep.subr.bf16.mxu0 %v1820
    %2626 = vmatpush1.bf16.msra.mxu0 %v1819
    %2627 = vmatprep.subr.bf16.mxu0 %v1826
    %2628 = vmatpush1.bf16.msra.mxu0 %v1825
    %2629 = vmatprep.subr.bf16.mxu0 %v1832
    %2630 = vmatpush1.bf16.msra.mxu0 %v1831
    %2631 = vmatprep.subr.bf16.mxu0 %v1838
    %2632 = vmatpush1.bf16.msra.mxu0 %v1837
    %2633 = vmatprep.subr.bf16.mxu0 %v1844
    %2634 = vmatpush1.bf16.msra.mxu0 %v1843
    %2635 = vmatprep.subr.bf16.mxu0 %v1850
    %2636 = vmatpush1.bf16.msra.mxu0 %v1849
    %2637 = vmatprep.subr.bf16.mxu0 %v1856
    %2638 = vmatpush1.bf16.msra.mxu0 %v1855
    %2639 = vmatprep.subr.bf16.mxu0 %v1862
    %2640 = vmatpush1.bf16.msra.mxu0 %v1861
    %2641 = vmatprep.subr.bf16.mxu0 %v1868
    %2642 = vmatpush1.bf16.msra.mxu0 %v1867
    %2643 = vmatprep.subr.bf16.mxu0 %v1874
    %2644 = vmatpush1.bf16.msra.mxu0 %v1873
    %2645 = vmatprep.subr.bf16.mxu0 %v1880
    %2646 = vmatpush1.bf16.msra.mxu0 %v1879
    %2647 = vmatprep.subr.bf16.mxu0 %v1886
    %2648 = vmatpush1.bf16.msra.mxu0 %v1885
    %2649 = vmatprep.subr.bf16.mxu0 %v1892
    %2650 = vmatpush1.bf16.msra.mxu0 %v1891
    %2651 = vmatprep.mubr.bf16.mxu0 %v608
    %2652 = vmatmul.mubr.bf16.gmra.mrb[0].mxu0 %v607
    %v2653 = vpop.f32.mrb[0].mxu0
    %v2654 = vadd.f32 %v922, %v2653
    %v2655 = vpop.f32.mrb[0].mxu0
    %v2656 = vadd.f32 %v926, %v2655
    %v2657 = vpop.f32.mrb[0].mxu0
    %v2658 = vpop.f32.mrb[0].mxu0
    %2659 = vdwg.mxu0
    %2660 = vmatprep.subr.bf16.mxu0 %v1898
    %2661 = vmatpush1.bf16.msra.mxu0 %v1897
    %2662 = vmatprep.subr.bf16.mxu0 %v1904
    %2663 = vmatpush1.bf16.msra.mxu0 %v1903
    %2664 = vmatprep.subr.bf16.mxu0 %v1910
    %2665 = vmatpush1.bf16.msra.mxu0 %v1909
    %2666 = vmatprep.subr.bf16.mxu0 %v1916
    %2667 = vmatpush1.bf16.msra.mxu0 %v1915
    %2668 = vmatprep.subr.bf16.mxu0 %v1922
    %2669 = vmatpush1.bf16.msra.mxu0 %v1921
    %2670 = vmatprep.subr.bf16.mxu0 %v1928
    %2671 = vmatpush1.bf16.msra.mxu0 %v1927
    %2672 = vmatprep.subr.bf16.mxu0 %v1934
    %2673 = vmatpush1.bf16.msra.mxu0 %v1933
    %2674 = vmatprep.subr.bf16.mxu0 %v1940
    %2675 = vmatpush1.bf16.msra.mxu0 %v1939
    %2676 = vmatprep.subr.bf16.mxu0 %v1946
    %2677 = vmatpush1.bf16.msra.mxu0 %v1945
    %2678 = vmatprep.subr.bf16.mxu0 %v1952
    %2679 = vmatpush1.bf16.msra.mxu0 %v1951
    %2680 = vmatprep.subr.bf16.mxu0 %v1958
    %2681 = vmatpush1.bf16.msra.mxu0 %v1957
    %2682 = vmatprep.subr.bf16.mxu0 %v1964
    %2683 = vmatpush1.bf16.msra.mxu0 %v1963
    %2684 = vmatprep.subr.bf16.mxu0 %v1970
    %2685 = vmatpush1.bf16.msra.mxu0 %v1969
    %2686 = vmatprep.subr.bf16.mxu0 %v1976
    %2687 = vmatpush1.bf16.msra.mxu0 %v1975
    %2688 = vmatprep.subr.bf16.mxu0 %v1982
    %2689 = vmatpush1.bf16.msra.mxu0 %v1981
    %2690 = vmatprep.subr.bf16.mxu0 %v1988
    %2691 = vmatpush1.bf16.msra.mxu0 %v1987
    %2692 = vmatprep.mubr.bf16.mxu0 %v610
    %2693 = vmatmul.mubr.bf16.gmra.mrb[0].mxu0 %v609
    %v2694 = vpop.f32.mrb[0].mxu0
    %v2695 = vadd.f32 %v2654, %v2694
    %v2696 = vpop.f32.mrb[0].mxu0
    %v2697 = vadd.f32 %v2656, %v2696
    %v2698 = vpop.f32.mrb[0].mxu0
    %v2699 = vpop.f32.mrb[0].mxu0
    %2700 = vdwg.mxu0
    %2701 = vmatprep.subr.bf16.mxu0 %v1994
    %2702 = vmatpush1.bf16.msra.mxu0 %v1993
    %2703 = vmatprep.subr.bf16.mxu0 %v2000
    %2704 = vmatpush1.bf16.msra.mxu0 %v1999
    %2705 = vmatprep.subr.bf16.mxu0 %v2006
    %2706 = vmatpush1.bf16.msra.mxu0 %v2005
    %2707 = vmatprep.subr.bf16.mxu0 %v2012
    %2708 = vmatpush1.bf16.msra.mxu0 %v2011
    %2709 = vmatprep.subr.bf16.mxu0 %v2018
    %2710 = vmatpush1.bf16.msra.mxu0 %v2017
    %2711 = vmatprep.subr.bf16.mxu0 %v2024
    %2712 = vmatpush1.bf16.msra.mxu0 %v2023
    %2713 = vmatprep.subr.bf16.mxu0 %v2030
    %2714 = vmatpush1.bf16.msra.mxu0 %v2029
    %2715 = vmatprep.subr.bf16.mxu0 %v2036
    %2716 = vmatpush1.bf16.msra.mxu0 %v2035
    %2717 = vmatprep.subr.bf16.mxu0 %v2042
    %2718 = vmatpush1.bf16.msra.mxu0 %v2041
    %2719 = vmatprep.subr.bf16.mxu0 %v2048
    %2720 = vmatpush1.bf16.msra.mxu0 %v2047
    %2721 = vmatprep.subr.bf16.mxu0 %v2054
    %2722 = vmatpush1.bf16.msra.mxu0 %v2053
    %2723 = vmatprep.subr.bf16.mxu0 %v2060
    %2724 = vmatpush1.bf16.msra.mxu0 %v2059
    %2725 = vmatprep.subr.bf16.mxu0 %v2066
    %2726 = vmatpush1.bf16.msra.mxu0 %v2065
    %2727 = vmatprep.subr.bf16.mxu0 %v2072
    %2728 = vmatpush1.bf16.msra.mxu0 %v2071
    %2729 = vmatprep.subr.bf16.mxu0 %v2078
    %2730 = vmatpush1.bf16.msra.mxu0 %v2077
    %2731 = vmatprep.subr.bf16.mxu0 %v2084
    %2732 = vmatpush1.bf16.msra.mxu0 %v2083
    %2733 = vmatprep.mubr.bf16.mxu0 %v612
    %2734 = vmatmul.mubr.bf16.gmra.mrb[0].mxu0 %v611
    %v2735 = vpop.f32.mrb[0].mxu0
    %v2736 = vadd.f32 %v2695, %v2735
    %v2737 = vpop.f32.mrb[0].mxu0
    %v2738 = vadd.f32 %v2697, %v2737
    %v2739 = vpop.f32.mrb[0].mxu0
    %v2740 = vpop.f32.mrb[0].mxu0
    %2741 = vdwg.mxu0
    %v2742 = vtanh.pop %v2490
    %v2743 = vtanh.pop %v2492
    %v2744 = vtanh.pop %v2613
    %v2745 = vtanh.pop %v2615
    %v2746 = vtanh.pop %v2736
    %v2747 = vtanh.pop %v2738
    %v2748 = vpack.c.bf16 %v2742, %v2742
    %v2749 = vpack.c.bf16 %v2743, %v2743
    %v2750 = vpack.c.bf16 %v2744, %v2744
    %v2751 = vpack.c.bf16 %v2745, %v2745
    %v2752 = vpack.c.bf16 %v2746, %v2746
    %v2753 = vpack.c.bf16 %v2747, %v2747
    %v2754 = vld [vmem:[#allocation12] sm:$0xf]
    %v2755 = vld [vmem:[#allocation12 + $0x4] sm:$0xf]
    %v2756 = vld [vmem:[#allocation12 + $0x8] sm:$0xf]
    %v2757 = vld [vmem:[#allocation12 + $0xc] sm:$0xf]
    %v2758 = vld [vmem:[#allocation12 + $0x10] sm:$0xf]
    %v2759 = vld [vmem:[#allocation12 + $0x14] sm:$0xf]
    %v2760 = vld [vmem:[#allocation12 + $0x18] sm:$0xf]
    %v2761 = vld [vmem:[#allocation12 + $0x1c] sm:$0xf]
    %v2762 = vld [vmem:[#allocation12 + $0x20] sm:$0xf]
    %v2763 = vld [vmem:[#allocation12 + $0x24] sm:$0xf]
    %v2764 = vld [vmem:[#allocation12 + $0x28] sm:$0xf]
    %v2765 = vld [vmem:[#allocation12 + $0x2c] sm:$0xf]
    %v2766 = vld [vmem:[#allocation12 + $0x30] sm:$0xf]
    %v2767 = vld [vmem:[#allocation12 + $0x34] sm:$0xf]
    %v2768 = vld [vmem:[#allocation12 + $0x38] sm:$0xf]
    %v2769 = vld [vmem:[#allocation12 + $0x3c] sm:$0xf]
    %v2770 = vld [vmem:[#allocation12 + $0x40] sm:$0xf]
    %v2771 = vld [vmem:[#allocation12 + $0x44] sm:$0xf]
    %v2772 = vld [vmem:[#allocation12 + $0x48] sm:$0xf]
    %v2773 = vld [vmem:[#allocation12 + $0x4c] sm:$0xf]
    %v2774 = vld [vmem:[#allocation12 + $0x50] sm:$0xf]
    %v2775 = vld [vmem:[#allocation12 + $0x54] sm:$0xf]
    %v2776 = vld [vmem:[#allocation12 + $0x58] sm:$0xf]
    %v2777 = vld [vmem:[#allocation12 + $0x5c] sm:$0xf]
    %v2778 = vld [vmem:[#allocation12 + $0x60] sm:$0xf]
    %v2779 = vld [vmem:[#allocation12 + $0x64] sm:$0xf]
    %v2780 = vld [vmem:[#allocation12 + $0x68] sm:$0xf]
    %v2781 = vld [vmem:[#allocation12 + $0x6c] sm:$0xf]
    %v2782 = vld [vmem:[#allocation12 + $0x70] sm:$0xf]
    %v2783 = vld [vmem:[#allocation12 + $0x74] sm:$0xf]
    %v2784 = vld [vmem:[#allocation12 + $0x78] sm:$0xf]
    %v2785 = vld [vmem:[#allocation12 + $0x7c] sm:$0xf]
    %v2786 = vld [vmem:[#allocation12 + $0x80] sm:$0xf]
    %v2787 = vld [vmem:[#allocation12 + $0x84] sm:$0xf]
    %v2788 = vld [vmem:[#allocation12 + $0x88] sm:$0xf]
    %v2789 = vld [vmem:[#allocation12 + $0x8c] sm:$0xf]
    %v2790 = vld [vmem:[#allocation12 + $0x90] sm:$0xf]
    %v2791 = vld [vmem:[#allocation12 + $0x94] sm:$0xf]
    %v2792 = vld [vmem:[#allocation12 + $0x98] sm:$0xf]
    %v2793 = vld [vmem:[#allocation12 + $0x9c] sm:$0xf]
    %v2794 = vld [vmem:[#allocation12 + $0xa0] sm:$0xf]
    %v2795 = vld [vmem:[#allocation12 + $0xa4] sm:$0xf]
    %v2796 = vld [vmem:[#allocation12 + $0xa8] sm:$0xf]
    %v2797 = vld [vmem:[#allocation12 + $0xac] sm:$0xf]
    %v2798 = vld [vmem:[#allocation12 + $0xb0] sm:$0xf]
    %v2799 = vld [vmem:[#allocation12 + $0xb4] sm:$0xf]
    %v2800 = vld [vmem:[#allocation12 + $0xb8] sm:$0xf]
    %v2801 = vld [vmem:[#allocation12 + $0xbc] sm:$0xf]
    %v2802 = vld [vmem:[#allocation12 + $0xc0] sm:$0xf]
    %v2803 = vld [vmem:[#allocation12 + $0xc4] sm:$0xf]
    %v2804 = vld [vmem:[#allocation12 + $0xc8] sm:$0xf]
    %v2805 = vld [vmem:[#allocation12 + $0xcc] sm:$0xf]
    %v2806 = vld [vmem:[#allocation12 + $0xd0] sm:$0xf]
    %v2807 = vld [vmem:[#allocation12 + $0xd4] sm:$0xf]
    %v2808 = vld [vmem:[#allocation12 + $0xd8] sm:$0xf]
    %v2809 = vld [vmem:[#allocation12 + $0xdc] sm:$0xf]
    %v2810 = vld [vmem:[#allocation12 + $0xe0] sm:$0xf]
    %v2811 = vld [vmem:[#allocation12 + $0xe4] sm:$0xf]
    %v2812 = vld [vmem:[#allocation12 + $0xe8] sm:$0xf]
    %v2813 = vld [vmem:[#allocation12 + $0xec] sm:$0xf]
    %v2814 = vld [vmem:[#allocation12 + $0xf0] sm:$0xf]
    %v2815 = vld [vmem:[#allocation12 + $0xf4] sm:$0xf]
    %v2816 = vld [vmem:[#allocation12 + $0xf8] sm:$0xf]
    %v2817 = vld [vmem:[#allocation12 + $0xfc] sm:$0xf]
    %v2818 = vld [vmem:[#allocation12 + $0x100] sm:$0xf]
    %v2819 = vld [vmem:[#allocation12 + $0x104] sm:$0xf]
    %v2820 = vld [vmem:[#allocation12 + $0x108] sm:$0xf]
    %v2821 = vld [vmem:[#allocation12 + $0x10c] sm:$0xf]
    %v2822 = vld [vmem:[#allocation12 + $0x110] sm:$0xf]
    %v2823 = vld [vmem:[#allocation12 + $0x114] sm:$0xf]
    %v2824 = vld [vmem:[#allocation12 + $0x118] sm:$0xf]
    %v2825 = vld [vmem:[#allocation12 + $0x11c] sm:$0xf]
    %v2826 = vld [vmem:[#allocation12 + $0x120] sm:$0xf]
    %v2827 = vld [vmem:[#allocation12 + $0x124] sm:$0xf]
    %v2828 = vld [vmem:[#allocation12 + $0x128] sm:$0xf]
    %v2829 = vld [vmem:[#allocation12 + $0x12c] sm:$0xf]
    %v2830 = vld [vmem:[#allocation12 + $0x130] sm:$0xf]
    %v2831 = vld [vmem:[#allocation12 + $0x134] sm:$0xf]
    %v2832 = vld [vmem:[#allocation12 + $0x138] sm:$0xf]
    %v2833 = vld [vmem:[#allocation12 + $0x13c] sm:$0xf]
    %v2834 = vld [vmem:[#allocation12 + $0x140] sm:$0xf]
    %v2835 = vld [vmem:[#allocation12 + $0x144] sm:$0xf]
    %v2836 = vld [vmem:[#allocation12 + $0x148] sm:$0xf]
    %v2837 = vld [vmem:[#allocation12 + $0x14c] sm:$0xf]
    %v2838 = vld [vmem:[#allocation12 + $0x150] sm:$0xf]
    %v2839 = vld [vmem:[#allocation12 + $0x154] sm:$0xf]
    %v2840 = vld [vmem:[#allocation12 + $0x158] sm:$0xf]
    %v2841 = vld [vmem:[#allocation12 + $0x15c] sm:$0xf]
    %v2842 = vld [vmem:[#allocation12 + $0x160] sm:$0xf]
    %v2843 = vld [vmem:[#allocation12 + $0x164] sm:$0xf]
    %v2844 = vld [vmem:[#allocation12 + $0x168] sm:$0xf]
    %v2845 = vld [vmem:[#allocation12 + $0x16c] sm:$0xf]
    %v2846 = vld [vmem:[#allocation12 + $0x170] sm:$0xf]
    %v2847 = vld [vmem:[#allocation12 + $0x174] sm:$0xf]
    %v2848 = vld [vmem:[#allocation12 + $0x178] sm:$0xf]
    %v2849 = vld [vmem:[#allocation12 + $0x17c] sm:$0xf]
    %v2850 = vld [vmem:[#allocation13] sm:$0x1]
    %v2852 = vlaneseq
    %v2853 = vshrl.u32 %v2852, 7
    %v2854 = vsub.s32 0, %v2853
    %v2855 = vrot.slane %v2850, %v2854
    %v2953 = vunpack.c.l.b16 %v2754
    %v2954 = vunpack.c.l.b16 %v2755
    %v2955 = vunpack.c.l.b16 %v2756
    %v2956 = vunpack.c.l.b16 %v2757
    %v2957 = vunpack.c.l.b16 %v2758
    %v2958 = vunpack.c.l.b16 %v2759
    %v2959 = vunpack.c.l.b16 %v2760
    %v2960 = vunpack.c.l.b16 %v2761
    %v2961 = vunpack.c.l.b16 %v2762
    %v2962 = vunpack.c.l.b16 %v2763
    %v2963 = vunpack.c.l.b16 %v2764
    %v2964 = vunpack.c.l.b16 %v2765
    %v2965 = vunpack.c.l.b16 %v2766
    %v2966 = vunpack.c.l.b16 %v2767
    %v2967 = vunpack.c.l.b16 %v2768
    %v2968 = vunpack.c.l.b16 %v2769
    %v2969 = vunpack.c.l.b16 %v2770
    %v2970 = vunpack.c.l.b16 %v2771
    %v2971 = vunpack.c.l.b16 %v2772
    %v2972 = vunpack.c.l.b16 %v2773
    %v2973 = vunpack.c.l.b16 %v2774
    %v2974 = vunpack.c.l.b16 %v2775
    %v2975 = vunpack.c.l.b16 %v2776
    %v2976 = vunpack.c.l.b16 %v2777
    %v2977 = vunpack.c.l.b16 %v2778
    %v2978 = vunpack.c.l.b16 %v2779
    %v2979 = vunpack.c.l.b16 %v2780
    %v2980 = vunpack.c.l.b16 %v2781
    %v2981 = vunpack.c.l.b16 %v2782
    %v2982 = vunpack.c.l.b16 %v2783
    %v2983 = vunpack.c.l.b16 %v2784
    %v2984 = vunpack.c.l.b16 %v2785
    %v2985 = vunpack.c.l.b16 %v2786
    %v2986 = vunpack.c.l.b16 %v2787
    %v2987 = vunpack.c.l.b16 %v2788
    %v2988 = vunpack.c.l.b16 %v2789
    %v2989 = vunpack.c.l.b16 %v2790
    %v2990 = vunpack.c.l.b16 %v2791
    %v2991 = vunpack.c.l.b16 %v2792
    %v2992 = vunpack.c.l.b16 %v2793
    %v2993 = vunpack.c.l.b16 %v2794
    %v2994 = vunpack.c.l.b16 %v2795
    %v2995 = vunpack.c.l.b16 %v2796
    %v2996 = vunpack.c.l.b16 %v2797
    %v2997 = vunpack.c.l.b16 %v2798
    %v2998 = vunpack.c.l.b16 %v2799
    %v2999 = vunpack.c.l.b16 %v2800
    %v3000 = vunpack.c.l.b16 %v2801
    %v3001 = vunpack.c.l.b16 %v2802
    %v3002 = vunpack.c.l.b16 %v2803
    %v3003 = vunpack.c.l.b16 %v2804
    %v3004 = vunpack.c.l.b16 %v2805
    %v3005 = vunpack.c.l.b16 %v2806
    %v3006 = vunpack.c.l.b16 %v2807
    %v3007 = vunpack.c.l.b16 %v2808
    %v3008 = vunpack.c.l.b16 %v2809
    %v3009 = vunpack.c.l.b16 %v2810
    %v3010 = vunpack.c.l.b16 %v2811
    %v3011 = vunpack.c.l.b16 %v2812
    %v3012 = vunpack.c.l.b16 %v2813
    %v3013 = vunpack.c.l.b16 %v2814
    %v3014 = vunpack.c.l.b16 %v2815
    %v3015 = vunpack.c.l.b16 %v2816
    %v3016 = vunpack.c.l.b16 %v2817
    %v3017 = vunpack.c.l.b16 %v2818
    %v3018 = vunpack.c.l.b16 %v2819
    %v3019 = vunpack.c.l.b16 %v2820
    %v3020 = vunpack.c.l.b16 %v2821
    %v3021 = vunpack.c.l.b16 %v2822
    %v3022 = vunpack.c.l.b16 %v2823
    %v3023 = vunpack.c.l.b16 %v2824
    %v3024 = vunpack.c.l.b16 %v2825
    %v3025 = vunpack.c.l.b16 %v2826
    %v3026 = vunpack.c.l.b16 %v2827
    %v3027 = vunpack.c.l.b16 %v2828
    %v3028 = vunpack.c.l.b16 %v2829
    %v3029 = vunpack.c.l.b16 %v2830
    %v3030 = vunpack.c.l.b16 %v2831
    %v3031 = vunpack.c.l.b16 %v2832
    %v3032 = vunpack.c.l.b16 %v2833
    %v3033 = vunpack.c.l.b16 %v2834
    %v3034 = vunpack.c.l.b16 %v2835
    %v3035 = vunpack.c.l.b16 %v2836
    %v3036 = vunpack.c.l.b16 %v2837
    %v3037 = vunpack.c.l.b16 %v2838
    %v3038 = vunpack.c.l.b16 %v2839
    %v3039 = vunpack.c.l.b16 %v2840
    %v3040 = vunpack.c.l.b16 %v2841
    %v3041 = vunpack.c.l.b16 %v2842
    %v3042 = vunpack.c.l.b16 %v2843
    %v3043 = vunpack.c.l.b16 %v2844
    %v3044 = vunpack.c.l.b16 %v2845
    %v3045 = vunpack.c.l.b16 %v2846
    %v3046 = vunpack.c.l.b16 %v2847
    %v3047 = vunpack.c.l.b16 %v2848
    %v3048 = vunpack.c.l.b16 %v2849
    %v3049 = vpack.c.b16 %v2954, %v2953
    %v3050 = vpack.c.b16 %v2956, %v2955
    %v3051 = vpack.c.b16 %v2958, %v2957
    %v3052 = vpack.c.b16 %v2960, %v2959
    %v3053 = vpack.c.b16 %v2962, %v2961
    %v3054 = vpack.c.b16 %v2964, %v2963
    %v3055 = vpack.c.b16 %v2966, %v2965
    %v3056 = vpack.c.b16 %v2968, %v2967
    %v3057 = vpack.c.b16 %v2970, %v2969
    %v3058 = vpack.c.b16 %v2972, %v2971
    %v3059 = vpack.c.b16 %v2974, %v2973
    %v3060 = vpack.c.b16 %v2976, %v2975
    %v3061 = vpack.c.b16 %v2978, %v2977
    %v3062 = vpack.c.b16 %v2980, %v2979
    %v3063 = vpack.c.b16 %v2982, %v2981
    %v3064 = vpack.c.b16 %v2984, %v2983
    %v3065 = vpack.c.b16 %v2986, %v2985
    %v3066 = vpack.c.b16 %v2988, %v2987
    %v3067 = vpack.c.b16 %v2990, %v2989
    %v3068 = vpack.c.b16 %v2992, %v2991
    %v3069 = vpack.c.b16 %v2994, %v2993
    %v3070 = vpack.c.b16 %v2996, %v2995
    %v3071 = vpack.c.b16 %v2998, %v2997
    %v3072 = vpack.c.b16 %v3000, %v2999
    %v3073 = vpack.c.b16 %v3002, %v3001
    %v3074 = vpack.c.b16 %v3004, %v3003
    %v3075 = vpack.c.b16 %v3006, %v3005
    %v3076 = vpack.c.b16 %v3008, %v3007
    %v3077 = vpack.c.b16 %v3010, %v3009
    %v3078 = vpack.c.b16 %v3012, %v3011
    %v3079 = vpack.c.b16 %v3014, %v3013
    %v3080 = vpack.c.b16 %v3016, %v3015
    %v3081 = vpack.c.b16 %v3018, %v3017
    %v3082 = vpack.c.b16 %v3020, %v3019
    %v3083 = vpack.c.b16 %v3022, %v3021
    %v3084 = vpack.c.b16 %v3024, %v3023
    %v3085 = vpack.c.b16 %v3026, %v3025
    %v3086 = vpack.c.b16 %v3028, %v3027
    %v3087 = vpack.c.b16 %v3030, %v3029
    %v3088 = vpack.c.b16 %v3032, %v3031
    %v3089 = vpack.c.b16 %v3034, %v3033
    %v3090 = vpack.c.b16 %v3036, %v3035
    %v3091 = vpack.c.b16 %v3038, %v3037
    %v3092 = vpack.c.b16 %v3040, %v3039
    %v3093 = vpack.c.b16 %v3042, %v3041
    %v3094 = vpack.c.b16 %v3044, %v3043
    %v3095 = vpack.c.b16 %v3046, %v3045
    %v3096 = vpack.c.b16 %v3048, %v3047
    %3145 = vmatprep.subr.bf16.mxu0 0
    %3146 = vmatpush1.bf16.msra.mxu0 %v3049
    %3147 = vmatprep.subr.bf16.mxu0 0
    %3148 = vmatpush1.bf16.msra.mxu0 %v3050
    %3149 = vmatprep.subr.bf16.mxu0 0
    %3150 = vmatpush1.bf16.msra.mxu0 %v3051
    %3151 = vmatprep.subr.bf16.mxu0 0
    %3152 = vmatpush1.bf16.msra.mxu0 %v3052
    %3153 = vmatprep.subr.bf16.mxu0 0
    %3154 = vmatpush1.bf16.msra.mxu0 %v3053
    %3155 = vmatprep.subr.bf16.mxu0 0
    %3156 = vmatpush1.bf16.msra.mxu0 %v3054
    %3157 = vmatprep.subr.bf16.mxu0 0
    %3158 = vmatpush1.bf16.msra.mxu0 %v3055
    %3159 = vmatprep.subr.bf16.mxu0 0
    %3160 = vmatpush1.bf16.msra.mxu0 %v3056
    %3161 = vmatprep.subr.bf16.mxu0 0
    %3162 = vmatpush1.bf16.msra.mxu0 %v3057
    %3163 = vmatprep.subr.bf16.mxu0 0
    %3164 = vmatpush1.bf16.msra.mxu0 %v3058
    %3165 = vmatprep.subr.bf16.mxu0 0
    %3166 = vmatpush1.bf16.msra.mxu0 %v3059
    %3167 = vmatprep.subr.bf16.mxu0 0
    %3168 = vmatpush1.bf16.msra.mxu0 %v3060
    %3169 = vmatprep.subr.bf16.mxu0 0
    %3170 = vmatpush1.bf16.msra.mxu0 %v3061
    %3171 = vmatprep.subr.bf16.mxu0 0
    %3172 = vmatpush1.bf16.msra.mxu0 %v3062
    %3173 = vmatprep.subr.bf16.mxu0 0
    %3174 = vmatpush1.bf16.msra.mxu0 %v3063
    %3175 = vmatprep.subr.bf16.mxu0 0
    %3176 = vmatpush1.bf16.msra.mxu0 %v3064
    %3177 = vmatprep.mubr.bf16.mxu0 %v2749
    %3178 = vmatmul.mubr.bf16.gmra.mrb[0].mxu0 %v2748
    %v3179 = vpop.f32.mrb[0].mxu0
    %v3180 = vadd.f32 %v2855, %v3179
    %v3181 = vpop.f32.mrb[0].mxu0
    %v3182 = vpop.f32.mrb[0].mxu0
    %v3183 = vpop.f32.mrb[0].mxu0
    %3184 = vdwg.mxu0
    %3185 = vmatprep.subr.bf16.mxu0 0
    %3186 = vmatpush1.bf16.msra.mxu0 %v3065
    %3187 = vmatprep.subr.bf16.mxu0 0
    %3188 = vmatpush1.bf16.msra.mxu0 %v3066
    %3189 = vmatprep.subr.bf16.mxu0 0
    %3190 = vmatpush1.bf16.msra.mxu0 %v3067
    %3191 = vmatprep.subr.bf16.mxu0 0
    %3192 = vmatpush1.bf16.msra.mxu0 %v3068
    %3193 = vmatprep.subr.bf16.mxu0 0
    %3194 = vmatpush1.bf16.msra.mxu0 %v3069
    %3195 = vmatprep.subr.bf16.mxu0 0
    %3196 = vmatpush1.bf16.msra.mxu0 %v3070
    %3197 = vmatprep.subr.bf16.mxu0 0
    %3198 = vmatpush1.bf16.msra.mxu0 %v3071
    %3199 = vmatprep.subr.bf16.mxu0 0
    %3200 = vmatpush1.bf16.msra.mxu0 %v3072
    %3201 = vmatprep.subr.bf16.mxu0 0
    %3202 = vmatpush1.bf16.msra.mxu0 %v3073
    %3203 = vmatprep.subr.bf16.mxu0 0
    %3204 = vmatpush1.bf16.msra.mxu0 %v3074
    %3205 = vmatprep.subr.bf16.mxu0 0
    %3206 = vmatpush1.bf16.msra.mxu0 %v3075
    %3207 = vmatprep.subr.bf16.mxu0 0
    %3208 = vmatpush1.bf16.msra.mxu0 %v3076
    %3209 = vmatprep.subr.bf16.mxu0 0
    %3210 = vmatpush1.bf16.msra.mxu0 %v3077
    %3211 = vmatprep.subr.bf16.mxu0 0
    %3212 = vmatpush1.bf16.msra.mxu0 %v3078
    %3213 = vmatprep.subr.bf16.mxu0 0
    %3214 = vmatpush1.bf16.msra.mxu0 %v3079
    %3215 = vmatprep.subr.bf16.mxu0 0
    %3216 = vmatpush1.bf16.msra.mxu0 %v3080
    %3217 = vmatprep.mubr.bf16.mxu0 %v2751
    %3218 = vmatmul.mubr.bf16.gmra.mrb[0].mxu0 %v2750
    %v3219 = vpop.f32.mrb[0].mxu0
    %v3220 = vadd.f32 %v3180, %v3219
    %v3221 = vpop.f32.mrb[0].mxu0
    %v3222 = vpop.f32.mrb[0].mxu0
    %v3223 = vpop.f32.mrb[0].mxu0
    %3224 = vdwg.mxu0
    %3225 = vmatprep.subr.bf16.mxu0 0
    %3226 = vmatpush1.bf16.msra.mxu0 %v3081
    %3227 = vmatprep.subr.bf16.mxu0 0
    %3228 = vmatpush1.bf16.msra.mxu0 %v3082
    %3229 = vmatprep.subr.bf16.mxu0 0
    %3230 = vmatpush1.bf16.msra.mxu0 %v3083
    %3231 = vmatprep.subr.bf16.mxu0 0
    %3232 = vmatpush1.bf16.msra.mxu0 %v3084
    %3233 = vmatprep.subr.bf16.mxu0 0
    %3234 = vmatpush1.bf16.msra.mxu0 %v3085
    %3235 = vmatprep.subr.bf16.mxu0 0
    %3236 = vmatpush1.bf16.msra.mxu0 %v3086
    %3237 = vmatprep.subr.bf16.mxu0 0
    %3238 = vmatpush1.bf16.msra.mxu0 %v3087
    %3239 = vmatprep.subr.bf16.mxu0 0
    %3240 = vmatpush1.bf16.msra.mxu0 %v3088
    %3241 = vmatprep.subr.bf16.mxu0 0
    %3242 = vmatpush1.bf16.msra.mxu0 %v3089
    %3243 = vmatprep.subr.bf16.mxu0 0
    %3244 = vmatpush1.bf16.msra.mxu0 %v3090
    %3245 = vmatprep.subr.bf16.mxu0 0
    %3246 = vmatpush1.bf16.msra.mxu0 %v3091
    %3247 = vmatprep.subr.bf16.mxu0 0
    %3248 = vmatpush1.bf16.msra.mxu0 %v3092
    %3249 = vmatprep.subr.bf16.mxu0 0
    %3250 = vmatpush1.bf16.msra.mxu0 %v3093
    %3251 = vmatprep.subr.bf16.mxu0 0
    %3252 = vmatpush1.bf16.msra.mxu0 %v3094
    %3253 = vmatprep.subr.bf16.mxu0 0
    %3254 = vmatpush1.bf16.msra.mxu0 %v3095
    %3255 = vmatprep.subr.bf16.mxu0 0
    %3256 = vmatpush1.bf16.msra.mxu0 %v3096
    %3257 = vmatprep.mubr.bf16.mxu0 %v2753
    %3258 = vmatmul.mubr.bf16.gmra.mrb[0].mxu0 %v2752
    %v3259 = vpop.f32.mrb[0].mxu0
    %v3260 = vadd.f32 %v3220, %v3259
    %v3261 = vpop.f32.mrb[0].mxu0
    %v3262 = vpop.f32.mrb[0].mxu0
    %v3263 = vpop.f32.mrb[0].mxu0
    %3264 = vdwg.mxu0
    %v3265 = vmax.f32 %v3260, 0.0
    %vm3266 = vcmp.ne.f32.partialorder %v3260, %v3260
    %v3267 = vadd.f32 %v3260, 0.0
    %v3268 = vand.u32 2147483647, %v3260
    %v3269 = vsub.f32 0.0, %v3268
    %v3270 = vmul.f32 %v3269, 1.442695
    %v3271 = vpow.pop %v3270
    %v3272 = vadd.f32 %v3271, 1.0
    %v3273 = vlog2.pop %v3272
    %v3274 = vmul.f32 %v3273, 0.6931472
    %v3275 = vmul.f32 -0.5, %v3271
    %v3276 = vadd.f32 %v3275, 1.0
    %v3277 = vmul.f32 %v3276, %v3271
    %v3278 = vand.u32 2147483647, %v3271
    %vm3279 = vcmp.lt.f32.partialorder %v3278, 0.0004427343
    %v3280 = vsel %vm3279, %v3277, %v3274
    %v3281 = vadd.f32 %v3265, %v3280
    %v3282 = vsel %vm3266, %v3267, %v3281
    %v3283 = vadd.f32 %v3282, 1.0
    %v3285 = vrot.slane %v3283, 6
    %vm3287 = vcmask 1041408
    %v3288 = vsel %vm3287, %v3260, %v3285
    %v3289 = vsel %vm266, %v3288, 0.0
    %3290 = vst [vmem:[%s9] sm:$0xff] %v3289
    // Predicated region
    $region70: #{sentence_pair_classifier_forward.1} parent=1 // pred_check
      _
    $region71: #{sentence_pair_classifier_forward.1} parent=1 // pred_check_branch
      %3292 = sbr.rel (0) target = $region73
    $region72: #{sentence_pair_classifier_forward.1} parent=1 // pred_region
      _
    $region73: #{sentence_pair_classifier_forward.1} parent=1 // pred_fallthru
      _
    // Predicated region
    $region74: #{sentence_pair_classifier_forward.1} parent=1 // pred_check
      _
    $region75: #{sentence_pair_classifier_forward.1} parent=1 // pred_check_branch
      %3294 = sbr.rel (0) target = $region77
    $region76: #{sentence_pair_classifier_forward.1} parent=1 // pred_region
      _
    $region77: #{sentence_pair_classifier_forward.1} parent=1 // pred_fallthru
      _
    %3295 = vsyncpa [#allocation3], 1
    %3296 = vsyncpa [#allocation5], 1
    %3297 = vsyncpa [#allocation8], 1
    %3298 = vsyncpa [#allocation11], 1
    %3299 = vsyncpa [#allocation14], 1

</llo_original>
